<compile_context>
chip_gen: v7x
topology: tpu7x:2x2x1
jax: 0.10.0
libtpu: 0.0.40
codegen_flags: <defaults>
</compile_context>

<pallas_src>
import math
from functools import partial

import jax
import jax.numpy as jnp
from jax import lax
from jax.experimental import pallas as pl
from jax.experimental.pallas import tpu as pltpu

# ---- HyenaOperator hyper-parameters (module defaults) -----------------------
D_MODEL = 32          # d_model
L_MAX = 64            # l_max (== sequence length of the test input)
ORDER = 2             # Hyena recurrence depth
FILTER_ORDER = 64     # width of implicit-filter FFN
EMB_DIM = 3           # positional embedding dim (HyenaFilter default)
BATCH = 2

LANES = 128           # vreg lane width
GROUPS = 4            # 4 lane groups of D=32 channels -> 128-lane packing
RES = 8               # residue decomposition of the long-conv lag (8-aligned)

# TODO(synk): non-default flags (outer_mixing, post_order_ffn, bidirectional,
# dropout>0, return_state) are not implemented; defaults are all off/identity.


# =============================== Pallas kernel ===============================
def hyena_kernel(u_ref, w_ref, misc_ref, o_ref, vpad_ref, *, F, L, D):
    """One grid step processes F batch elements (row-stacked, F*L rows)."""
    f32 = jnp.float32
    bf16 = jnp.bfloat16
    W3 = 3 * D
    G = GROUPS
    J = L // RES
    n_pass = (RES * F) // G          # passes over the residue decomposition
    rpp = G // F                     # residues handled per pass

    rows_fl = lax.broadcasted_iota(jnp.int32, (F * L, 1), 0)
    pos = rows_fl % L                # position within each batch element
    rows_l = lax.broadcasted_iota(jnp.int32, (L, 1), 0)

    u = u_ref[0]                                                   # (F*L, D)

    # ---- fused in_proj: ONE (F*L, D) @ (D, 3D) MXU matmul + one bias --------
    win = w_ref[:, 0:W3]                                           # bf16
    wout = w_ref[:, W3:W3 + D]                                     # bf16
    up = jnp.dot(u.astype(bf16), win, preferred_element_type=f32)
    up = up + misc_ref[0:1, 0:W3]                                  # (F*L, 3D)

    # ---- depthwise causal short conv (width 3), in vregs via roll + mask ----
    # pos-mask also kills the 1/2-row cross-batch leak when F > 1.
    up_m1 = jnp.where(pos >= 1, pltpu.roll(up, 1, axis=0), 0.0)
    up_m2 = jnp.where(pos >= 2, pltpu.roll(up, 2, axis=0), 0.0)
    wsf = misc_ref[2:5, 0:W3]                                      # taps [t-2,t-1,t]
    sc = (wsf[0:1, :] * up_m2 + wsf[1:2, :] * up_m1 + wsf[2:3, :] * up
          + misc_ref[1:2, 0:W3])                                   # (F*L, 3D)

    # split packed branches (lane slices) and apply the first Hyena gate
    x0 = sc[:, 0:D]
    x1 = sc[:, D:2 * D]
    v = sc[:, 2 * D:3 * D] * x1                                    # (F*L, D)

    # ---- long causal conv (== fftconv), residue-decomposed, 128-lane packed --
    # scratch rows [0, L) = zeros, rows [L, 2L) = v packed along lanes:
    # lane group g holds batch (g % F), so every slice in the loop is an
    # 8-aligned, fully lane-dense (L, 128) tile and sublane shifts never mix
    # batches.  Re-written every grid step (megacore-safe).
    vpad_ref[0:L, :] = jnp.zeros((L, G * D), f32)
    for g in range(G):
        b = g % F
        vpad_ref[L:2 * L, g * D:(g + 1) * D] = v[b * L:(b + 1) * L, :]

    # fftconv bias term; yconv is lane-packed over the F fused batch elements
    yconv = misc_ref[5:6, 0:F * D] * vpad_ref[L:2 * L, 0:F * D]    # (L, F*D)

    # lag d = 8*j + r ; pass p handles residues r = rpp*p + q (q = 0..rpp-1);
    # lane group g of the packed scratch -> (batch g % F, residue rpp*p + g//F)
    for p in range(n_pass):
        # j = 0 term initializes the accumulator (no zero materialization)
        acc = misc_ref[8 + p * J:9 + p * J, :] * vpad_ref[L:2 * L, :]
        for j in range(1, J):
            lo = L - RES * j                          # static, multiple of 8
            acc = acc + (misc_ref[8 + p * J + j:9 + p * J + j, :]
                         * vpad_ref[lo:lo + L, :])
        for q in range(rpp):
            r = rpp * p + q
            z = acc[:, q * F * D:(q + 1) * F * D]     # (L, F*D)
            if r > 0:
                z = jnp.where(rows_l >= r, pltpu.roll(z, r, axis=0), 0.0)
            yconv = yconv + z

    # ---- second gate + out_proj ----------------------------------------------
    if F == 1:
        ystack = yconv                                             # (L, D)
    else:  # un-pack the batch lanes back to row-stacked order
        ystack = jnp.concatenate(
            [yconv[:, b * D:(b + 1) * D] for b in range(F)], axis=0)  # (F*L, D)
    y = ystack * x0
    out = jnp.dot(y.astype(bf16), wout, preferred_element_type=f32)
    out = out + misc_ref[6:7, 0:D]
    o_ref[0] = out.astype(o_ref.dtype)


# ============================ host-side packing ===============================
def _pack_weights(params, D):
    # fused in_proj (D,3D) next to out_proj (D,D): one lane-dense (D,4D) bf16 slab
    win_all = jnp.transpose(params["win"], (1, 0, 2)).reshape(D, 3 * D)
    return jnp.concatenate([win_all, params["wout"]], axis=1).astype(jnp.bfloat16)


def _pack_misc(params, k, L, D, F):
    # one f32 slab: small biases/taps + prepacked long-conv tap matrix
    W3 = 3 * D
    G = GROUPS
    J = L // RES
    n_pass = (RES * F) // G
    rpp = G // F

    bin_all = params["bin"].reshape(1, W3)
    bsf_all = params["bsf"].reshape(1, W3)
    wsf_all = jnp.transpose(params["wsf"], (1, 0, 2)).reshape(3, W3)

    # taps[p*J + j, g*D + d] = k[8*j + (rpp*p + g//F), d]
    k_r = k.reshape(J, RES, D)                    # k_r[j, r] = k[8j + r]
    rows = []
    for p in range(n_pass):
        for j in range(J):
            rows.append(jnp.concatenate(
                [k_r[j, rpp * p + g // F] for g in range(G)], axis=0))
    taps = jnp.stack(rows, axis=0)                # (n_pass*J, G*D)

    misc = jnp.zeros((8 + n_pass * J, G * D), jnp.float32)
    misc = misc.at[0, 0:W3].set(bin_all[0])                         # in_proj bias
    misc = misc.at[1, 0:W3].set(bsf_all[0])                         # short-conv bias
    misc = misc.at[2:5, 0:W3].set(wsf_all)                          # short-conv taps
    misc = misc.at[5, :].set(jnp.tile(params["bfilt"][0], G))       # fftconv bias x4
    misc = misc.at[6, 0:D].set(params["bout"][0])                   # out_proj bias
    misc = misc.at[8:, :].set(taps)                                 # long-conv taps
    return misc


def _fuse_batch_into_one_step():
    """Single-TensorCore chips (v5e / v6e): fuse the batch into one grid step
    (per-step + prologue overhead dominates there).  Megacore chips (v7x, also
    v4/v5p) and unknown backends keep grid=(B,) 'parallel' so the batch splits
    across TensorCores."""
    try:
        kind = jax.devices()[0].device_kind.lower()
    except Exception:
        return False
    single_core = ("v5e", "v5 lite", "v5lite", "v6e", "v6 lite", "v6lite")
    return any(s in kind for s in single_core)


# ================================ entry point =================================
def hyena_operator(u, params, fuse_batch=None):
    B, L, D = u.shape
    assert L % RES == 0 and GROUPS * D == LANES
    if fuse_batch is None:
        fuse_batch = _fuse_batch_into_one_step()
    F = B if fuse_batch else 1
    n_steps = B // F

    k = hyena_implicit_filter(L, params, D)        # (L, D) implicit filter (glue)
    w_slab = _pack_weights(params, D)
    misc = _pack_misc(params, k, L, D, F)

    u_r = u.reshape(n_steps, F * L, D)

    kernel = partial(hyena_kernel, F=F, L=L, D=D)
    out = pl.pallas_call(
        kernel,
        out_shape=jax.ShapeDtypeStruct((n_steps, F * L, D), jnp.float32),
        grid_spec=pltpu.PrefetchScalarGridSpec(
            num_scalar_prefetch=0,
            grid=(n_steps,),
            in_specs=[
                pl.BlockSpec((1, F * L, D), lambda b: (b, 0, 0)),   # u
                pl.BlockSpec((D, 4 * D), lambda b: (0, 0)),         # bf16 weight slab
                pl.BlockSpec(misc.shape, lambda b: (0, 0)),         # f32 misc slab
            ],
            out_specs=pl.BlockSpec((1, F * L, D), lambda b: (b, 0, 0)),
            scratch_shapes=[
                pltpu.VMEM((2 * L, GROUPS * D), jnp.float32),       # packed padded v
            ]),
        compiler_params=pltpu.CompilerParams(
            dimension_semantics=("parallel",) if n_steps > 1 else ("arbitrary",)),
    )(u_r, w_slab, misc)
    return out.reshape(B, L, D)


# ===================== HyenaFilter.filter(L) in plain JAX =====================
def hyena_implicit_filter(L, params, D):
    # PositionalEmbedding(emb_dim=3, seq_len=l_max)
    bands = (EMB_DIM - 1) // 2
    t = jnp.linspace(0.0, 1.0, L_MAX, dtype=jnp.float32)[:, None]
    t_rescaled = jnp.linspace(0.0, L_MAX - 1.0, L_MAX, dtype=jnp.float32)[:, None]
    w = 2.0 * math.pi * t_rescaled / L_MAX
    f = jnp.linspace(1e-4, bands - 1, bands, dtype=jnp.float32)[None, :]
    zc = jnp.exp(-1j * (f * w).astype(jnp.complex64))
    z = jnp.concatenate([t, zc.real, zc.imag], axis=-1).astype(jnp.float32)
    z, t = z[:L], t[:L]

    # implicit_filter: Linear(3,64) Sin [Linear(64,64) Sin]x2 Linear(64,D,no-bias)
    h = jnp.sin(params["freq0"] * (z @ params["W0"] + params["b0"]))
    h = jnp.sin(params["freq1"] * (h @ params["W1"] + params["b1"]))
    h = jnp.sin(params["freq2"] * (h @ params["W2"] + params["b2"]))
    h = h @ params["Wf"]                                          # (L, D)

    # ExponentialModulation (defaults: fast=0.3, slow=1.5, target=1e-2, shift=0)
    max_decay = math.log(1e-2) / 0.3
    min_decay = math.log(1e-2) / 1.5
    deltas = jnp.linspace(min_decay, max_decay, D, dtype=jnp.float32)[None, :]
    decay = jnp.exp(-t * jnp.abs(deltas))
    return h * decay


# ========================= deterministic synthetic init ======================
def init_params(key, D):
    ks = jax.random.split(key, 16)
    n = lambda k, shape, s: jax.random.normal(k, shape, jnp.float32) * s
    p = {}
    p["win"] = n(ks[0], (3, D, D), 1.0 / math.sqrt(D))      # in_proj (D -> 3D), 3 blocks
    p["bin"] = n(ks[1], (3, 1, D), 0.02)
    p["wsf"] = n(ks[2], (3, 3, D), 1.0 / math.sqrt(3))      # depthwise conv, taps [t-2,t-1,t]
    p["bsf"] = n(ks[3], (3, 1, D), 0.02)
    p["wout"] = n(ks[4], (D, D), 1.0 / math.sqrt(D))        # out_proj
    p["bout"] = n(ks[5], (1, D), 0.02)
    p["bfilt"] = n(ks[6], (1, D), 1.0)                      # HyenaFilter.bias ~ randn(d)
    p["W0"] = n(ks[7], (EMB_DIM, FILTER_ORDER), 1.0 / math.sqrt(EMB_DIM))
    p["b0"] = n(ks[8], (FILTER_ORDER,), 0.02)
    p["W1"] = n(ks[9], (FILTER_ORDER, FILTER_ORDER), 1.0 / math.sqrt(FILTER_ORDER))
    p["b1"] = n(ks[10], (FILTER_ORDER,), 0.02)
    p["W2"] = n(ks[11], (FILTER_ORDER, FILTER_ORDER), 1.0 / math.sqrt(FILTER_ORDER))
    p["b2"] = n(ks[12], (FILTER_ORDER,), 0.02)
    p["Wf"] = n(ks[13], (FILTER_ORDER, D), 1.0 / math.sqrt(FILTER_ORDER))
    p["freq0"] = jnp.ones((1, FILTER_ORDER), jnp.float32)   # Sin freq (w=1)
    p["freq1"] = jnp.ones((1, FILTER_ORDER), jnp.float32)
    p["freq2"] = jnp.ones((1, FILTER_ORDER), jnp.float32)
    return p


# ============================ pure-JAX reference =============================
def reference_forward(u, params):
    # Matmuls use bf16 MXU inputs with f32 accumulation, matching the kernel;
    # everything else is f32.  fftconv uses torch semantics (pad to 2L).
    bf16 = jnp.bfloat16
    B, L, D = u.shape
    k = hyena_implicit_filter(L, params, D)
    win, bin_, wsf, bsf = params["win"], params["bin"], params["wsf"], params["bsf"]
    branches = []
    for i in range(3):
        up = jnp.einsum("bld,dc->blc", u.astype(bf16), win[i].astype(bf16),
                        preferred_element_type=jnp.float32) + bin_[i]       # (B, L, D)
        up_pad = jnp.pad(up, ((0, 0), (2, 0), (0, 0)))
        sc = (wsf[i, 0][None, None, :] * up_pad[:, 0:L]
              + wsf[i, 1][None, None, :] * up_pad[:, 1:L + 1]
              + wsf[i, 2][None, None, :] * up_pad[:, 2:L + 2]) + bsf[i]
        branches.append(sc)
    x0, x1, v = branches
    v = v * x1
    fft_size = 2 * L
    kf = jnp.fft.rfft(k.T, n=fft_size)                            # (D, F)
    vf = jnp.fft.rfft(jnp.swapaxes(v, 1, 2), n=fft_size)          # (B, D, F)
    y = jnp.fft.irfft(vf * kf[None], n=fft_size)[..., :L]
    y = jnp.swapaxes(y, 1, 2)
    y = y + params["bfilt"] * v
    y = y * x0
    return jnp.einsum("blc,cd->bld", y.astype(bf16), params["wout"].astype(bf16),
                      preferred_element_type=jnp.float32) + params["bout"]


if __name__ == "__main__":
    key = jax.random.PRNGKey(0)
    pkey, ukey = jax.random.split(key)
    params = init_params(pkey, D_MODEL)
    u = jax.random.normal(ukey, (BATCH, L_MAX, D_MODEL), jnp.float32)

    ref = reference_forward(u, params)

    # chip-auto-selected layout (batch-fused single step on single-TC chips,
    # 2-step parallel grid on megacore chips)
    out = jax.block_until_ready(hyena_operator(u, params))
    assert out.shape == (BATCH, L_MAX, D_MODEL)
    assert bool(jnp.all(jnp.isfinite(out)))
    err = float(jnp.max(jnp.abs(out - ref)))
    assert err < 5e-2, f"auto variant: max abs error vs reference: {err}"

    # validate both explicit variants as well (both must stay correct anywhere)
    for fuse in (False, True):
        out_v = jax.block_until_ready(hyena_operator(u, params, fuse_batch=fuse))
        err_v = float(jnp.max(jnp.abs(out_v - ref)))
        assert err_v < 5e-2, f"fuse_batch={fuse}: max abs error vs reference: {err_v}"

    print("KERNEL_OK")
</pallas_src>

<mosaic_0001>
module attributes {stable_mosaic.version = 11 : i64} {
  func.func @hyena_kernel(%arg0: i32, %arg1: memref<1x64x32xf32, #tpu.memory_space<vmem>>, %arg2: memref<32x128xbf16, #tpu.memory_space<vmem>>, %arg3: memref<24x128xf32, #tpu.memory_space<vmem>>, %arg4: memref<1x64x32xf32, #tpu.memory_space<vmem>>, %arg5: memref<128x128xf32, #tpu.memory_space<vmem>>) attributes {dimension_semantics = [#tpu.dimension_semantics<parallel>], iteration_bounds = array<i64: 2>, scalar_prefetch = 0 : i64, scratch_operands = 1 : i64, tpu.core_type = #tpu.core_type<tc>, window_params = [{transform_indices = @transform_0, window_bounds = array<i64: 1, 64, 32>}, {pipeline_mode = #tpu.pipeline_mode<synchronous>, transform_indices = @transform_1, window_bounds = array<i64: 32, 128>}, {pipeline_mode = #tpu.pipeline_mode<synchronous>, transform_indices = @transform_2, window_bounds = array<i64: 24, 128>}, {transform_indices = @transform_3, window_bounds = array<i64: 1, 64, 32>}]} {
    %0 = tpu.iota {dimensions = array<i32: 0>} : vector<64x1xi32>
    %c64_i32 = arith.constant 64 : i32
    %c0_i32 = arith.constant 0 : i32
    %1 = arith.cmpi eq, %c64_i32, %c0_i32 : i32
    %c1_i32 = arith.constant 1 : i32
    %2 = arith.select %1, %c1_i32, %c64_i32 : i32
    %3 = vector.broadcast %2 : i32 to vector<64x1xi32>
    %4 = arith.remsi %0, %3 : vector<64x1xi32>
    %c0_i32_0 = arith.constant 0 : i32
    %5 = vector.broadcast %c0_i32_0 : i32 to vector<64x1xi32>
    %6 = arith.cmpi ne, %4, %5 : vector<64x1xi32>
    %c0_i32_1 = arith.constant 0 : i32
    %7 = vector.broadcast %c0_i32_1 : i32 to vector<64x1xi32>
    %8 = arith.cmpi slt, %4, %7 : vector<64x1xi32>
    %c0_i32_2 = arith.constant 0 : i32
    %9 = arith.cmpi slt, %2, %c0_i32_2 : i32
    %10 = vector.broadcast %9 : i1 to vector<64x1xi1>
    %11 = vector.broadcast %10 : vector<64x1xi1> to vector<64x1xi1>
    %12 = arith.xori %8, %11 : vector<64x1xi1>
    %13 = arith.andi %12, %6 : vector<64x1xi1>
    %14 = vector.broadcast %2 : i32 to vector<64x1xi32>
    %15 = arith.addi %4, %14 : vector<64x1xi32>
    %16 = arith.select %13, %15, %4 : vector<64x1xi1>, vector<64x1xi32>
    %17 = tpu.iota {dimensions = array<i32: 0>} : vector<64x1xi32>
    %c0 = arith.constant 0 : index
    %c0_3 = arith.constant 0 : index
    %c0_4 = arith.constant 0 : index
    %18 = vector.load %arg1[%c0, %c0_3, %c0_4] : memref<1x64x32xf32, #tpu.memory_space<vmem>>, vector<1x64x32xf32>
    %19 = vector.shape_cast %18 : vector<1x64x32xf32> to vector<64x32xf32>
    %c0_5 = arith.constant 0 : index
    %c0_6 = arith.constant 0 : index
    %20 = vector.load %arg2[%c0_5, %c0_6] : memref<32x128xbf16, #tpu.memory_space<vmem>>, vector<32x96xbf16>
    %c0_7 = arith.constant 0 : index
    %c96 = arith.constant 96 : index
    %21 = vector.load %arg2[%c0_7, %c96] : memref<32x128xbf16, #tpu.memory_space<vmem>>, vector<32x32xbf16>
    %22 = arith.truncf %19 : vector<64x32xf32> to vector<64x32xbf16>
    %cst = arith.constant dense<0.000000e+00> : vector<64x96xf32>
    %23 = tpu.matmul %22, %20, %cst {dimension_numbers = #tpu.dot_dimension_numbers<[1], [0], [0], [1], [0, 0, 1, 1], [], []>} : vector<64x32xbf16>, vector<32x96xbf16>, vector<64x96xf32> -> vector<64x96xf32>
    %c0_8 = arith.constant 0 : index
    %c0_9 = arith.constant 0 : index
    %24 = vector.load %arg3[%c0_8, %c0_9] : memref<24x128xf32, #tpu.memory_space<vmem>>, vector<1x96xf32>
    %25 = vector.broadcast %24 : vector<1x96xf32> to vector<64x96xf32>
    %26 = arith.addf %23, %25 : vector<64x96xf32>
    %c1_i32_10 = arith.constant 1 : i32
    %27 = vector.broadcast %c1_i32_10 : i32 to vector<64x1xi32>
    %28 = arith.cmpi sge, %16, %27 : vector<64x1xi32>
    %c1_i32_11 = arith.constant 1 : i32
    %29 = tpu.dynamic_rotate %26 by %c1_i32_11 dim 0 : vector<64x96xf32>, i32 -> vector<64x96xf32>
    %cst_12 = arith.constant 0.000000e+00 : f32
    %30 = vector.shape_cast %28 : vector<64x1xi1> to vector<64x1xi1>
    %31 = vector.broadcast %30 : vector<64x1xi1> to vector<64x96xi1>
    %32 = vector.broadcast %cst_12 : f32 to vector<64x96xf32>
    %33 = arith.select %31, %29, %32 : vector<64x96xi1>, vector<64x96xf32>
    %c2_i32 = arith.constant 2 : i32
    %34 = vector.broadcast %c2_i32 : i32 to vector<64x1xi32>
    %35 = arith.cmpi sge, %16, %34 : vector<64x1xi32>
    %c2_i32_13 = arith.constant 2 : i32
    %36 = tpu.dynamic_rotate %26 by %c2_i32_13 dim 0 : vector<64x96xf32>, i32 -> vector<64x96xf32>
    %cst_14 = arith.constant 0.000000e+00 : f32
    %37 = vector.shape_cast %35 : vector<64x1xi1> to vector<64x1xi1>
    %38 = vector.broadcast %37 : vector<64x1xi1> to vector<64x96xi1>
    %39 = vector.broadcast %cst_14 : f32 to vector<64x96xf32>
    %40 = arith.select %38, %36, %39 : vector<64x96xi1>, vector<64x96xf32>
    %c2 = arith.constant 2 : index
    %c0_15 = arith.constant 0 : index
    %41 = vector.load %arg3[%c2, %c0_15] : memref<24x128xf32, #tpu.memory_space<vmem>>, vector<3x96xf32>
    %42 = vector.extract_strided_slice %41 {offsets = [0, 0], sizes = [1, 96], strides = [1, 1]} : vector<3x96xf32> to vector<1x96xf32>
    %43 = vector.broadcast %42 : vector<1x96xf32> to vector<64x96xf32>
    %44 = arith.mulf %43, %40 : vector<64x96xf32>
    %45 = vector.extract_strided_slice %41 {offsets = [1, 0], sizes = [1, 96], strides = [1, 1]} : vector<3x96xf32> to vector<1x96xf32>
    %46 = vector.broadcast %45 : vector<1x96xf32> to vector<64x96xf32>
    %47 = arith.mulf %46, %33 : vector<64x96xf32>
    %48 = arith.addf %44, %47 : vector<64x96xf32>
    %49 = vector.extract_strided_slice %41 {offsets = [2, 0], sizes = [1, 96], strides = [1, 1]} : vector<3x96xf32> to vector<1x96xf32>
    %50 = vector.broadcast %49 : vector<1x96xf32> to vector<64x96xf32>
    %51 = arith.mulf %50, %26 : vector<64x96xf32>
    %52 = arith.addf %48, %51 : vector<64x96xf32>
    %c1 = arith.constant 1 : index
    %c0_16 = arith.constant 0 : index
    %53 = vector.load %arg3[%c1, %c0_16] : memref<24x128xf32, #tpu.memory_space<vmem>>, vector<1x96xf32>
    %54 = vector.broadcast %53 : vector<1x96xf32> to vector<64x96xf32>
    %55 = arith.addf %52, %54 : vector<64x96xf32>
    %56 = vector.extract_strided_slice %55 {offsets = [0, 0], sizes = [64, 32], strides = [1, 1]} : vector<64x96xf32> to vector<64x32xf32>
    %57 = vector.extract_strided_slice %55 {offsets = [0, 32], sizes = [64, 32], strides = [1, 1]} : vector<64x96xf32> to vector<64x32xf32>
    %58 = vector.extract_strided_slice %55 {offsets = [0, 64], sizes = [64, 32], strides = [1, 1]} : vector<64x96xf32> to vector<64x32xf32>
    %59 = arith.mulf %58, %57 : vector<64x32xf32>
    %cst_17 = arith.constant 0.000000e+00 : f32
    %60 = vector.broadcast %cst_17 : f32 to vector<64x128xf32>
    %c0_18 = arith.constant 0 : index
    %c0_19 = arith.constant 0 : index
    %61 = vector.load %arg5[%c0_18, %c0_19] : memref<128x128xf32, #tpu.memory_space<vmem>>, vector<64x128xf32>
    tpu.vector_store %arg5[%c0_18, %c0_19], %60 {strides = array<i32>} : memref<128x128xf32, #tpu.memory_space<vmem>>, vector<64x128xf32>,
    %c64 = arith.constant 64 : index
    %c0_20 = arith.constant 0 : index
    %62 = vector.load %arg5[%c64, %c0_20] : memref<128x128xf32, #tpu.memory_space<vmem>>, vector<64x32xf32>
    tpu.vector_store %arg5[%c64, %c0_20], %59 {strides = array<i32>} : memref<128x128xf32, #tpu.memory_space<vmem>>, vector<64x32xf32>,
    %c64_21 = arith.constant 64 : index
    %c32 = arith.constant 32 : index
    %63 = vector.load %arg5[%c64_21, %c32] : memref<128x128xf32, #tpu.memory_space<vmem>>, vector<64x32xf32>
    tpu.vector_store %arg5[%c64_21, %c32], %59 {strides = array<i32>} : memref<128x128xf32, #tpu.memory_space<vmem>>, vector<64x32xf32>,
    %c64_22 = arith.constant 64 : index
    %c64_23 = arith.constant 64 : index
    %64 = vector.load %arg5[%c64_22, %c64_23] : memref<128x128xf32, #tpu.memory_space<vmem>>, vector<64x32xf32>
    tpu.vector_store %arg5[%c64_22, %c64_23], %59 {strides = array<i32>} : memref<128x128xf32, #tpu.memory_space<vmem>>, vector<64x32xf32>,
    %c64_24 = arith.constant 64 : index
    %c96_25 = arith.constant 96 : index
    %65 = vector.load %arg5[%c64_24, %c96_25] : memref<128x128xf32, #tpu.memory_space<vmem>>, vector<64x32xf32>
    tpu.vector_store %arg5[%c64_24, %c96_25], %59 {strides = array<i32>} : memref<128x128xf32, #tpu.memory_space<vmem>>, vector<64x32xf32>,
    %c5 = arith.constant 5 : index
    %c0_26 = arith.constant 0 : index
    %66 = vector.load %arg3[%c5, %c0_26] : memref<24x128xf32, #tpu.memory_space<vmem>>, vector<1x32xf32>
    %c64_27 = arith.constant 64 : index
    %c0_28 = arith.constant 0 : index
    %67 = vector.load %arg5[%c64_27, %c0_28] : memref<128x128xf32, #tpu.memory_space<vmem>>, vector<64x32xf32>
    %68 = vector.broadcast %66 : vector<1x32xf32> to vector<64x32xf32>
    %69 = arith.mulf %68, %67 : vector<64x32xf32>
    %c8 = arith.constant 8 : index
    %c0_29 = arith.constant 0 : index
    %70 = vector.load %arg3[%c8, %c0_29] : memref<24x128xf32, #tpu.memory_space<vmem>>, vector<1x128xf32>
    %c64_30 = arith.constant 64 : index
    %c0_31 = arith.constant 0 : index
    %71 = vector.load %arg5[%c64_30, %c0_31] : memref<128x128xf32, #tpu.memory_space<vmem>>, vector<64x128xf32>
    %72 = vector.broadcast %70 : vector<1x128xf32> to vector<64x128xf32>
    %73 = arith.mulf %72, %71 : vector<64x128xf32>
    %c9 = arith.constant 9 : index
    %c0_32 = arith.constant 0 : index
    %74 = vector.load %arg3[%c9, %c0_32] : memref<24x128xf32, #tpu.memory_space<vmem>>, vector<1x128xf32>
    %c56 = arith.constant 56 : index
    %c0_33 = arith.constant 0 : index
    %75 = vector.load %arg5[%c56, %c0_33] : memref<128x128xf32, #tpu.memory_space<vmem>>, vector<64x128xf32>
    %76 = vector.broadcast %74 : vector<1x128xf32> to vector<64x128xf32>
    %77 = arith.mulf %76, %75 : vector<64x128xf32>
    %78 = arith.addf %73, %77 : vector<64x128xf32>
    %c10 = arith.constant 10 : index
    %c0_34 = arith.constant 0 : index
    %79 = vector.load %arg3[%c10, %c0_34] : memref<24x128xf32, #tpu.memory_space<vmem>>, vector<1x128xf32>
    %c48 = arith.constant 48 : index
    %c0_35 = arith.constant 0 : index
    %80 = vector.load %arg5[%c48, %c0_35] : memref<128x128xf32, #tpu.memory_space<vmem>>, vector<64x128xf32>
    %81 = vector.broadcast %79 : vector<1x128xf32> to vector<64x128xf32>
    %82 = arith.mulf %81, %80 : vector<64x128xf32>
    %83 = arith.addf %78, %82 : vector<64x128xf32>
    %c11 = arith.constant 11 : index
    %c0_36 = arith.constant 0 : index
    %84 = vector.load %arg3[%c11, %c0_36] : memref<24x128xf32, #tpu.memory_space<vmem>>, vector<1x128xf32>
    %c40 = arith.constant 40 : index
    %c0_37 = arith.constant 0 : index
    %85 = vector.load %arg5[%c40, %c0_37] : memref<128x128xf32, #tpu.memory_space<vmem>>, vector<64x128xf32>
    %86 = vector.broadcast %84 : vector<1x128xf32> to vector<64x128xf32>
    %87 = arith.mulf %86, %85 : vector<64x128xf32>
    %88 = arith.addf %83, %87 : vector<64x128xf32>
    %c12 = arith.constant 12 : index
    %c0_38 = arith.constant 0 : index
    %89 = vector.load %arg3[%c12, %c0_38] : memref<24x128xf32, #tpu.memory_space<vmem>>, vector<1x128xf32>
    %c32_39 = arith.constant 32 : index
    %c0_40 = arith.constant 0 : index
    %90 = vector.load %arg5[%c32_39, %c0_40] : memref<128x128xf32, #tpu.memory_space<vmem>>, vector<64x128xf32>
    %91 = vector.broadcast %89 : vector<1x128xf32> to vector<64x128xf32>
    %92 = arith.mulf %91, %90 : vector<64x128xf32>
    %93 = arith.addf %88, %92 : vector<64x128xf32>
    %c13 = arith.constant 13 : index
    %c0_41 = arith.constant 0 : index
    %94 = vector.load %arg3[%c13, %c0_41] : memref<24x128xf32, #tpu.memory_space<vmem>>, vector<1x128xf32>
    %c24 = arith.constant 24 : index
    %c0_42 = arith.constant 0 : index
    %95 = vector.load %arg5[%c24, %c0_42] : memref<128x128xf32, #tpu.memory_space<vmem>>, vector<64x128xf32>
    %96 = vector.broadcast %94 : vector<1x128xf32> to vector<64x128xf32>
    %97 = arith.mulf %96, %95 : vector<64x128xf32>
    %98 = arith.addf %93, %97 : vector<64x128xf32>
    %c14 = arith.constant 14 : index
    %c0_43 = arith.constant 0 : index
    %99 = vector.load %arg3[%c14, %c0_43] : memref<24x128xf32, #tpu.memory_space<vmem>>, vector<1x128xf32>
    %c16 = arith.constant 16 : index
    %c0_44 = arith.constant 0 : index
    %100 = vector.load %arg5[%c16, %c0_44] : memref<128x128xf32, #tpu.memory_space<vmem>>, vector<64x128xf32>
    %101 = vector.broadcast %99 : vector<1x128xf32> to vector<64x128xf32>
    %102 = arith.mulf %101, %100 : vector<64x128xf32>
    %103 = arith.addf %98, %102 : vector<64x128xf32>
    %c15 = arith.constant 15 : index
    %c0_45 = arith.constant 0 : index
    %104 = vector.load %arg3[%c15, %c0_45] : memref<24x128xf32, #tpu.memory_space<vmem>>, vector<1x128xf32>
    %c8_46 = arith.constant 8 : index
    %c0_47 = arith.constant 0 : index
    %105 = vector.load %arg5[%c8_46, %c0_47] : memref<128x128xf32, #tpu.memory_space<vmem>>, vector<64x128xf32>
    %106 = vector.broadcast %104 : vector<1x128xf32> to vector<64x128xf32>
    %107 = arith.mulf %106, %105 : vector<64x128xf32>
    %108 = arith.addf %103, %107 : vector<64x128xf32>
    %109 = vector.extract_strided_slice %108 {offsets = [0, 0], sizes = [64, 32], strides = [1, 1]} : vector<64x128xf32> to vector<64x32xf32>
    %110 = arith.addf %69, %109 : vector<64x32xf32>
    %111 = vector.extract_strided_slice %108 {offsets = [0, 32], sizes = [64, 32], strides = [1, 1]} : vector<64x128xf32> to vector<64x32xf32>
    %c1_i32_48 = arith.constant 1 : i32
    %112 = vector.broadcast %c1_i32_48 : i32 to vector<64x1xi32>
    %113 = arith.cmpi sge, %17, %112 : vector<64x1xi32>
    %c1_i32_49 = arith.constant 1 : i32
    %114 = tpu.dynamic_rotate %111 by %c1_i32_49 dim 0 : vector<64x32xf32>, i32 -> vector<64x32xf32>
    %cst_50 = arith.constant 0.000000e+00 : f32
    %115 = vector.shape_cast %113 : vector<64x1xi1> to vector<64x1xi1>
    %116 = vector.broadcast %115 : vector<64x1xi1> to vector<64x32xi1>
    %117 = vector.broadcast %cst_50 : f32 to vector<64x32xf32>
    %118 = arith.select %116, %114, %117 : vector<64x32xi1>, vector<64x32xf32>
    %119 = arith.addf %110, %118 : vector<64x32xf32>
    %120 = vector.extract_strided_slice %108 {offsets = [0, 64], sizes = [64, 32], strides = [1, 1]} : vector<64x128xf32> to vector<64x32xf32>
    %c2_i32_51 = arith.constant 2 : i32
    %121 = vector.broadcast %c2_i32_51 : i32 to vector<64x1xi32>
    %122 = arith.cmpi sge, %17, %121 : vector<64x1xi32>
    %c2_i32_52 = arith.constant 2 : i32
    %123 = tpu.dynamic_rotate %120 by %c2_i32_52 dim 0 : vector<64x32xf32>, i32 -> vector<64x32xf32>
    %cst_53 = arith.constant 0.000000e+00 : f32
    %124 = vector.shape_cast %122 : vector<64x1xi1> to vector<64x1xi1>
    %125 = vector.broadcast %124 : vector<64x1xi1> to vector<64x32xi1>
    %126 = vector.broadcast %cst_53 : f32 to vector<64x32xf32>
    %127 = arith.select %125, %123, %126 : vector<64x32xi1>, vector<64x32xf32>
    %128 = arith.addf %119, %127 : vector<64x32xf32>
    %129 = vector.extract_strided_slice %108 {offsets = [0, 96], sizes = [64, 32], strides = [1, 1]} : vector<64x128xf32> to vector<64x32xf32>
    %c3_i32 = arith.constant 3 : i32
    %130 = vector.broadcast %c3_i32 : i32 to vector<64x1xi32>
    %131 = arith.cmpi sge, %17, %130 : vector<64x1xi32>
    %c3_i32_54 = arith.constant 3 : i32
    %132 = tpu.dynamic_rotate %129 by %c3_i32_54 dim 0 : vector<64x32xf32>, i32 -> vector<64x32xf32>
    %cst_55 = arith.constant 0.000000e+00 : f32
    %133 = vector.shape_cast %131 : vector<64x1xi1> to vector<64x1xi1>
    %134 = vector.broadcast %133 : vector<64x1xi1> to vector<64x32xi1>
    %135 = vector.broadcast %cst_55 : f32 to vector<64x32xf32>
    %136 = arith.select %134, %132, %135 : vector<64x32xi1>, vector<64x32xf32>
    %137 = arith.addf %128, %136 : vector<64x32xf32>
    %c16_56 = arith.constant 16 : index
    %c0_57 = arith.constant 0 : index
    %138 = vector.load %arg3[%c16_56, %c0_57] : memref<24x128xf32, #tpu.memory_space<vmem>>, vector<1x128xf32>
    %c64_58 = arith.constant 64 : index
    %c0_59 = arith.constant 0 : index
    %139 = vector.load %arg5[%c64_58, %c0_59] : memref<128x128xf32, #tpu.memory_space<vmem>>, vector<64x128xf32>
    %140 = vector.broadcast %138 : vector<1x128xf32> to vector<64x128xf32>
    %141 = arith.mulf %140, %139 : vector<64x128xf32>
    %c17 = arith.constant 17 : index
    %c0_60 = arith.constant 0 : index
    %142 = vector.load %arg3[%c17, %c0_60] : memref<24x128xf32, #tpu.memory_space<vmem>>, vector<1x128xf32>
    %c56_61 = arith.constant 56 : index
    %c0_62 = arith.constant 0 : index
    %143 = vector.load %arg5[%c56_61, %c0_62] : memref<128x128xf32, #tpu.memory_space<vmem>>, vector<64x128xf32>
    %144 = vector.broadcast %142 : vector<1x128xf32> to vector<64x128xf32>
    %145 = arith.mulf %144, %143 : vector<64x128xf32>
    %146 = arith.addf %141, %145 : vector<64x128xf32>
    %c18 = arith.constant 18 : index
    %c0_63 = arith.constant 0 : index
    %147 = vector.load %arg3[%c18, %c0_63] : memref<24x128xf32, #tpu.memory_space<vmem>>, vector<1x128xf32>
    %c48_64 = arith.constant 48 : index
    %c0_65 = arith.constant 0 : index
    %148 = vector.load %arg5[%c48_64, %c0_65] : memref<128x128xf32, #tpu.memory_space<vmem>>, vector<64x128xf32>
    %149 = vector.broadcast %147 : vector<1x128xf32> to vector<64x128xf32>
    %150 = arith.mulf %149, %148 : vector<64x128xf32>
    %151 = arith.addf %146, %150 : vector<64x128xf32>
    %c19 = arith.constant 19 : index
    %c0_66 = arith.constant 0 : index
    %152 = vector.load %arg3[%c19, %c0_66] : memref<24x128xf32, #tpu.memory_space<vmem>>, vector<1x128xf32>
    %c40_67 = arith.constant 40 : index
    %c0_68 = arith.constant 0 : index
    %153 = vector.load %arg5[%c40_67, %c0_68] : memref<128x128xf32, #tpu.memory_space<vmem>>, vector<64x128xf32>
    %154 = vector.broadcast %152 : vector<1x128xf32> to vector<64x128xf32>
    %155 = arith.mulf %154, %153 : vector<64x128xf32>
    %156 = arith.addf %151, %155 : vector<64x128xf32>
    %c20 = arith.constant 20 : index
    %c0_69 = arith.constant 0 : index
    %157 = vector.load %arg3[%c20, %c0_69] : memref<24x128xf32, #tpu.memory_space<vmem>>, vector<1x128xf32>
    %c32_70 = arith.constant 32 : index
    %c0_71 = arith.constant 0 : index
    %158 = vector.load %arg5[%c32_70, %c0_71] : memref<128x128xf32, #tpu.memory_space<vmem>>, vector<64x128xf32>
    %159 = vector.broadcast %157 : vector<1x128xf32> to vector<64x128xf32>
    %160 = arith.mulf %159, %158 : vector<64x128xf32>
    %161 = arith.addf %156, %160 : vector<64x128xf32>
    %c21 = arith.constant 21 : index
    %c0_72 = arith.constant 0 : index
    %162 = vector.load %arg3[%c21, %c0_72] : memref<24x128xf32, #tpu.memory_space<vmem>>, vector<1x128xf32>
    %c24_73 = arith.constant 24 : index
    %c0_74 = arith.constant 0 : index
    %163 = vector.load %arg5[%c24_73, %c0_74] : memref<128x128xf32, #tpu.memory_space<vmem>>, vector<64x128xf32>
    %164 = vector.broadcast %162 : vector<1x128xf32> to vector<64x128xf32>
    %165 = arith.mulf %164, %163 : vector<64x128xf32>
    %166 = arith.addf %161, %165 : vector<64x128xf32>
    %c22 = arith.constant 22 : index
    %c0_75 = arith.constant 0 : index
    %167 = vector.load %arg3[%c22, %c0_75] : memref<24x128xf32, #tpu.memory_space<vmem>>, vector<1x128xf32>
    %c16_76 = arith.constant 16 : index
    %c0_77 = arith.constant 0 : index
    %168 = vector.load %arg5[%c16_76, %c0_77] : memref<128x128xf32, #tpu.memory_space<vmem>>, vector<64x128xf32>
    %169 = vector.broadcast %167 : vector<1x128xf32> to vector<64x128xf32>
    %170 = arith.mulf %169, %168 : vector<64x128xf32>
    %171 = arith.addf %166, %170 : vector<64x128xf32>
    %c23 = arith.constant 23 : index
    %c0_78 = arith.constant 0 : index
    %172 = vector.load %arg3[%c23, %c0_78] : memref<24x128xf32, #tpu.memory_space<vmem>>, vector<1x128xf32>
    %c8_79 = arith.constant 8 : index
    %c0_80 = arith.constant 0 : index
    %173 = vector.load %arg5[%c8_79, %c0_80] : memref<128x128xf32, #tpu.memory_space<vmem>>, vector<64x128xf32>
    %174 = vector.broadcast %172 : vector<1x128xf32> to vector<64x128xf32>
    %175 = arith.mulf %174, %173 : vector<64x128xf32>
    %176 = arith.addf %171, %175 : vector<64x128xf32>
    %177 = vector.extract_strided_slice %176 {offsets = [0, 0], sizes = [64, 32], strides = [1, 1]} : vector<64x128xf32> to vector<64x32xf32>
    %c4_i32 = arith.constant 4 : i32
    %178 = vector.broadcast %c4_i32 : i32 to vector<64x1xi32>
    %179 = arith.cmpi sge, %17, %178 : vector<64x1xi32>
    %c4_i32_81 = arith.constant 4 : i32
    %180 = tpu.dynamic_rotate %177 by %c4_i32_81 dim 0 : vector<64x32xf32>, i32 -> vector<64x32xf32>
    %cst_82 = arith.constant 0.000000e+00 : f32
    %181 = vector.shape_cast %179 : vector<64x1xi1> to vector<64x1xi1>
    %182 = vector.broadcast %181 : vector<64x1xi1> to vector<64x32xi1>
    %183 = vector.broadcast %cst_82 : f32 to vector<64x32xf32>
    %184 = arith.select %182, %180, %183 : vector<64x32xi1>, vector<64x32xf32>
    %185 = arith.addf %137, %184 : vector<64x32xf32>
    %186 = vector.extract_strided_slice %176 {offsets = [0, 32], sizes = [64, 32], strides = [1, 1]} : vector<64x128xf32> to vector<64x32xf32>
    %c5_i32 = arith.constant 5 : i32
    %187 = vector.broadcast %c5_i32 : i32 to vector<64x1xi32>
    %188 = arith.cmpi sge, %17, %187 : vector<64x1xi32>
    %c5_i32_83 = arith.constant 5 : i32
    %189 = tpu.dynamic_rotate %186 by %c5_i32_83 dim 0 : vector<64x32xf32>, i32 -> vector<64x32xf32>
    %cst_84 = arith.constant 0.000000e+00 : f32
    %190 = vector.shape_cast %188 : vector<64x1xi1> to vector<64x1xi1>
    %191 = vector.broadcast %190 : vector<64x1xi1> to vector<64x32xi1>
    %192 = vector.broadcast %cst_84 : f32 to vector<64x32xf32>
    %193 = arith.select %191, %189, %192 : vector<64x32xi1>, vector<64x32xf32>
    %194 = arith.addf %185, %193 : vector<64x32xf32>
    %195 = vector.extract_strided_slice %176 {offsets = [0, 64], sizes = [64, 32], strides = [1, 1]} : vector<64x128xf32> to vector<64x32xf32>
    %c6_i32 = arith.constant 6 : i32
    %196 = vector.broadcast %c6_i32 : i32 to vector<64x1xi32>
    %197 = arith.cmpi sge, %17, %196 : vector<64x1xi32>
    %c6_i32_85 = arith.constant 6 : i32
    %198 = tpu.dynamic_rotate %195 by %c6_i32_85 dim 0 : vector<64x32xf32>, i32 -> vector<64x32xf32>
    %cst_86 = arith.constant 0.000000e+00 : f32
    %199 = vector.shape_cast %197 : vector<64x1xi1> to vector<64x1xi1>
    %200 = vector.broadcast %199 : vector<64x1xi1> to vector<64x32xi1>
    %201 = vector.broadcast %cst_86 : f32 to vector<64x32xf32>
    %202 = arith.select %200, %198, %201 : vector<64x32xi1>, vector<64x32xf32>
    %203 = arith.addf %194, %202 : vector<64x32xf32>
    %204 = vector.extract_strided_slice %176 {offsets = [0, 96], sizes = [64, 32], strides = [1, 1]} : vector<64x128xf32> to vector<64x32xf32>
    %c7_i32 = arith.constant 7 : i32
    %205 = vector.broadcast %c7_i32 : i32 to vector<64x1xi32>
    %206 = arith.cmpi sge, %17, %205 : vector<64x1xi32>
    %c7_i32_87 = arith.constant 7 : i32
    %207 = tpu.dynamic_rotate %204 by %c7_i32_87 dim 0 : vector<64x32xf32>, i32 -> vector<64x32xf32>
    %cst_88 = arith.constant 0.000000e+00 : f32
    %208 = vector.shape_cast %206 : vector<64x1xi1> to vector<64x1xi1>
    %209 = vector.broadcast %208 : vector<64x1xi1> to vector<64x32xi1>
    %210 = vector.broadcast %cst_88 : f32 to vector<64x32xf32>
    %211 = arith.select %209, %207, %210 : vector<64x32xi1>, vector<64x32xf32>
    %212 = arith.addf %203, %211 : vector<64x32xf32>
    %213 = arith.mulf %212, %56 : vector<64x32xf32>
    %214 = arith.truncf %213 : vector<64x32xf32> to vector<64x32xbf16>
    %cst_89 = arith.constant dense<0.000000e+00> : vector<64x32xf32>
    %215 = tpu.matmul %214, %21, %cst_89 {dimension_numbers = #tpu.dot_dimension_numbers<[1], [0], [0], [1], [0, 0, 1, 1], [], []>} : vector<64x32xbf16>, vector<32x32xbf16>, vector<64x32xf32> -> vector<64x32xf32>
    %c6 = arith.constant 6 : index
    %c0_90 = arith.constant 0 : index
    %216 = vector.load %arg3[%c6, %c0_90] : memref<24x128xf32, #tpu.memory_space<vmem>>, vector<1x32xf32>
    %217 = vector.broadcast %216 : vector<1x32xf32> to vector<64x32xf32>
    %218 = arith.addf %215, %217 : vector<64x32xf32>
    %c0_91 = arith.constant 0 : index
    %c0_92 = arith.constant 0 : index
    %c0_93 = arith.constant 0 : index
    %219 = vector.load %arg4[%c0_91, %c0_92, %c0_93] : memref<1x64x32xf32, #tpu.memory_space<vmem>>, vector<1x64x32xf32>
    %220 = vector.shape_cast %219 : vector<1x64x32xf32> to vector<64x32xf32>
    %221 = vector.shape_cast %218 : vector<64x32xf32> to vector<1x64x32xf32>
    tpu.vector_store %arg4[%c0_91, %c0_92, %c0_93], %221 {strides = array<i32>} : memref<1x64x32xf32, #tpu.memory_space<vmem>>, vector<1x64x32xf32>,
    return
  }
  func.func @transform_0(%arg0: i32) -> (i32, i32, i32) {
    %c0_i32 = arith.constant 0 : i32
    %c0_i32_0 = arith.constant 0 : i32
    %c0_i32_1 = arith.constant 0 : i32
    return %arg0, %c0_i32, %c0_i32_0 : i32, i32, i32
  }
  func.func @transform_1(%arg0: i32) -> (i32, i32) {
    %c0_i32 = arith.constant 0 : i32
    %c0_i32_0 = arith.constant 0 : i32
    %c0_i32_1 = arith.constant 0 : i32
    return %c0_i32, %c0_i32_0 : i32, i32
  }
  func.func @transform_2(%arg0: i32) -> (i32, i32) {
    %c0_i32 = arith.constant 0 : i32
    %c0_i32_0 = arith.constant 0 : i32
    %c0_i32_1 = arith.constant 0 : i32
    return %c0_i32, %c0_i32_0 : i32, i32
  }
  func.func @transform_3(%arg0: i32) -> (i32, i32, i32) {
    %c0_i32 = arith.constant 0 : i32
    %c0_i32_0 = arith.constant 0 : i32
    %c0_i32_1 = arith.constant 0 : i32
    return %arg0, %c0_i32, %c0_i32_0 : i32, i32, i32
  }
}

</mosaic_0001>

<llo_original>
// kernel: tpu_custom_call.1
$region0: #{tpu_custom_call.1}
  #allocation0 [shape = 'u32[]', space=smem, size = 0x4, offset = 0x4, fixed_abs, tag = 'smem constant byte address 0x4 - core index']
  #allocation1 [shape = 'u32[144,128]{1,0:T(1,128)}', space=vmem, size = 0x12000, scoped, tag = 'internal scratch']
  #allocation2 [shape = 'f32[128,128]{1,0:T(8,128)}', space=vmem, size = 0x10000, scoped, tag = 'scratch operand']
  %s0 = inlined_call_operand.vmem [shape: f32[2,64,32], index: 0, kind: input, shape index: {}]
  %s1 = inlined_call_operand.vmem [shape: bf16[32,128], index: 1, kind: input, shape index: {}]
  %s2 = inlined_call_operand.vmem [shape: f32[24,128], index: 2, kind: input, shape index: {}]
  %s3 = inlined_call_operand.vmem [shape: f32[2,64,32], index: 3, kind: output, shape index: {}]
  %s4 = sld [smem:[#allocation0]]
  $region45: #{tpu_custom_call.1} parent=0
    _
  %s6 = ssub.s32 1, %s4
  %s7 = scalar_select 0, %s6, %s4
  loop: start=0, step=1, limit=4
  $region2: #{tpu_custom_call.1} parent=0 // loop_pre_header
    _
  $region3: #{tpu_custom_call.1} parent=0 // loop_header
    %s9 = sphi 0, %s13
    %p10 = scmp.ge.s32.totalorder %s9, 4
    %s19 = sphi 0, %s21
    %s22 = sphi 0, %s19
    %s23 = sphi 0, %s22
    %s39 = sphi 0, %s23
    %s43 = sphi 0, %s43
    %s45 = sphi 0, %s43
    %s46 = sphi 0, %s45
    %s60 = sphi 0, %s46
    %s64 = sphi 0, %s64
    %s66 = sphi 0, %s64
    %s67 = sphi 0, %s66
    %s81 = sphi 0, %s67
    %s87 = sphi 0, %s89
    %s90 = sphi 0, %s87
    %s91 = sphi 0, %s90
    %s107 = sphi 0, %s91
  $region4: #{tpu_custom_call.1} parent=0 // loop_header_branch
    %12 = sbr.rel (%p10) target = $region8
  $region5: #{tpu_custom_call.1} parent=0 // loop_body
    %s14 = ssub.s32 %s9, 1
    %s15 = ssub.s32 %s9, 2
    %s16 = sadd.s32 %s9, 1
    %s17 = ssub.s32 %s9, %s16
    %p18 = scmp.eq.s32.totalorder %s17, 0
    %s20 = sadd.s32 %s19, 1
    %s21 = scalar_select %p18, %s19, %s20
    %p24 = pneg %p18
    %p25 = scmp.eq.s32.totalorder %s9, 1
    %p26 = por %p24, %p25
    %p27 = scmp.ne.s32.totalorder %s19, %s22
    %p28 = scmp.eq.s32.totalorder %s9, 0
    %p29 = por %p27, %p28
    %p30 = scmp.ne.s32.totalorder %s19, %s22
    %p31 = scmp.eq.s32.totalorder %s14, 1
    %p32 = por %p30, %p31
    %p33 = scmp.ne.s32.totalorder %s22, %s23
    %p34 = scmp.eq.s32.totalorder %s14, 0
    %p35 = por %p33, %p34
    %p36 = scmp.ne.s32.totalorder %s22, %s23
    %p37 = scmp.eq.s32.totalorder %s15, 1
    %p38 = por %p36, %p37
    %p40 = scmp.ne.s32.totalorder %s23, %s39
    %p41 = scmp.eq.s32.totalorder %s15, 0
    %p42 = por %p40, %p41
    %s44 = sadd.s32 %s43, 1
    %p47 = scmp.eq.s32.totalorder %s9, 1
    %p48 = scmp.ne.s32.totalorder %s43, %s45
    %p49 = scmp.eq.s32.totalorder %s9, 0
    %p50 = por %p48, %p49
    %p51 = scmp.ne.s32.totalorder %s43, %s45
    %p52 = scmp.eq.s32.totalorder %s14, 1
    %p53 = por %p51, %p52
    %p54 = scmp.ne.s32.totalorder %s45, %s46
    %p55 = scmp.eq.s32.totalorder %s14, 0
    %p56 = por %p54, %p55
    %p57 = scmp.ne.s32.totalorder %s45, %s46
    %p58 = scmp.eq.s32.totalorder %s15, 1
    %p59 = por %p57, %p58
    %p61 = scmp.ne.s32.totalorder %s46, %s60
    %p62 = scmp.eq.s32.totalorder %s15, 0
    %p63 = por %p61, %p62
    %s65 = sadd.s32 %s64, 1
    %p68 = scmp.eq.s32.totalorder %s9, 1
    %p69 = scmp.ne.s32.totalorder %s64, %s66
    %p70 = scmp.eq.s32.totalorder %s9, 0
    %p71 = por %p69, %p70
    %p72 = scmp.ne.s32.totalorder %s64, %s66
    %p73 = scmp.eq.s32.totalorder %s14, 1
    %p74 = por %p72, %p73
    %p75 = scmp.ne.s32.totalorder %s66, %s67
    %p76 = scmp.eq.s32.totalorder %s14, 0
    %p77 = por %p75, %p76
    %p78 = scmp.ne.s32.totalorder %s66, %s67
    %p79 = scmp.eq.s32.totalorder %s15, 1
    %p80 = por %p78, %p79
    %p82 = scmp.ne.s32.totalorder %s67, %s81
    %p83 = scmp.eq.s32.totalorder %s15, 0
    %p84 = por %p82, %p83
    %s85 = ssub.s32 %s9, %s16
    %p86 = scmp.eq.s32.totalorder %s85, 0
    %s88 = sadd.s32 %s87, 1
    %s89 = scalar_select %p86, %s87, %s88
    %p92 = pneg %p86
    %p93 = scmp.eq.s32.totalorder %s9, 1
    %p94 = por %p92, %p93
    %p95 = scmp.ne.s32.totalorder %s87, %s90
    %p96 = scmp.eq.s32.totalorder %s9, 0
    %p97 = por %p95, %p96
    %p98 = scmp.ne.s32.totalorder %s87, %s90
    %p99 = scmp.eq.s32.totalorder %s14, 1
    %p100 = por %p98, %p99
    %p101 = scmp.ne.s32.totalorder %s90, %s91
    %p102 = scmp.eq.s32.totalorder %s14, 0
    %p103 = por %p101, %p102
    %p104 = scmp.ne.s32.totalorder %s90, %s91
    %p105 = scmp.eq.s32.totalorder %s15, 1
    %p106 = por %p104, %p105
    %p108 = scmp.ne.s32.totalorder %s91, %s107
    %p109 = scmp.eq.s32.totalorder %s15, 0
    %p110 = por %p108, %p109
    %p111 = scmp.le.s32.totalorder 1, %s9
    %p112 = scmp.lt.s32.totalorder %s9, 3
    %p113 = pnand %p111, %p112
    %p114 = pneg %p113
    // Predicated region
    $region9: #{tpu_custom_call.1} parent=5 // pred_check
      _
    $region10: #{tpu_custom_call.1} parent=5 // pred_check_branch
      %116 = sbr.rel (%p113) target = $region12
    $region11: #{tpu_custom_call.1} parent=5 // pred_region
      %s117 = ssub.s32 %s9, 1
      // Predicated region
      $region13: #{tpu_custom_call.1} parent=11 // pred_check
        %p118 = pneg %p56
      $region14: #{tpu_custom_call.1} parent=11 // pred_check_branch
        %120 = sbr.rel (%p118) target = $region16
      $region15: #{tpu_custom_call.1} parent=11 // pred_region
        _
      $region16: #{tpu_custom_call.1} parent=11 // pred_fallthru
        _
      // Predicated region
      $region17: #{tpu_custom_call.1} parent=11 // pred_check
        %p121 = pneg %p77
      $region18: #{tpu_custom_call.1} parent=11 // pred_check_branch
        %123 = sbr.rel (%p121) target = $region20
      $region19: #{tpu_custom_call.1} parent=11 // pred_region
        _
      $region20: #{tpu_custom_call.1} parent=11 // pred_fallthru
        _
    $region12: #{tpu_custom_call.1} parent=5 // pred_fallthru
      _
    %p124 = scmp.lt.s32.totalorder %s9, 2
    // Predicated region
    $region21: #{tpu_custom_call.1} parent=5 // pred_check
      %p125 = pneg %p124
    $region22: #{tpu_custom_call.1} parent=5 // pred_check_branch
      %127 = sbr.rel (%p125) target = $region24
    $region23: #{tpu_custom_call.1} parent=5 // pred_region
      // Predicated region
      $region25: #{tpu_custom_call.1} parent=23 // pred_check
        %p128 = pneg %p29
      $region26: #{tpu_custom_call.1} parent=23 // pred_check_branch
        %130 = sbr.rel (%p128) target = $region28
      $region27: #{tpu_custom_call.1} parent=23 // pred_region
        %p131 = scmp.lt.s32.totalorder %s9, 1
        %s132 = scalar_select %p131, %s9, 1
        %s133 = smul.addr %s132, 8
        %s134 = smul.addr %s133, 8
        %s135 = scalar_lea.vmem %s0, %s134
      $region28: #{tpu_custom_call.1} parent=23 // pred_fallthru
        _
    $region24: #{tpu_custom_call.1} parent=5 // pred_fallthru
      _
    %p136 = scmp.le.s32.totalorder 1, %s9
    %p137 = scmp.lt.s32.totalorder %s9, 3
    %p138 = pnand %p136, %p137
    %p139 = pneg %p138
    // Predicated region
    $region29: #{tpu_custom_call.1} parent=5 // pred_check
      _
    $region30: #{tpu_custom_call.1} parent=5 // pred_check_branch
      %141 = sbr.rel (%p138) target = $region32
    $region31: #{tpu_custom_call.1} parent=5 // pred_region
      %s142 = ssub.s32 %s9, 1
      %p143 = scmp.lt.s32.totalorder %s14, 1
      %s144 = scalar_select %p143, %s14, 1
      %s145 = smul.addr %s144, 8
      %s146 = smul.addr %s145, 8
      %s147 = scalar_lea.vmem %s0, %s146
      %p148 = pneg %p35
      %p149 = pneg %p32
      %p150 = pneg %p56
      %p151 = pneg %p53
      %p152 = pneg %p77
      %p153 = pneg %p74
      %p154 = pneg %p103
      %p155 = pneg %p100
      %p156 = scmp.lt.s32.totalorder %s14, 1
      %s157 = scalar_select %p156, %s14, 1
      %s158 = smul.addr %s157, 8
      %s159 = smul.addr %s158, 8
      %s160 = scalar_lea.vmem %s3, %s159
      %p161 = scmp.lt.s32.totalorder %s14, 1
      %s162 = scalar_select %p161, %s14, 1
      %s163 = smul.addr %s162, 8
      %s164 = smul.addr %s163, 8
      %s165 = scalar_lea.vmem %s0, %s164
      %p166 = scmp.lt.s32.totalorder %s14, 1
      %s167 = scalar_select %p166, %s14, 1
      %s168 = smul.addr %s167, 8
      %s169 = smul.addr %s168, 8
      %s170 = scalar_lea.vmem %s3, %s169
      %v172 = vlaneseq
      %v173 = vshrl.u32 %v172, 7
      %v174 = vadd.s32 %v173, 8
      %v175 = vadd.s32 %v173, 16
      %v176 = vadd.s32 %v173, 24
      %v177 = vadd.s32 %v173, 32
      %v178 = vadd.s32 %v173, 40
      %v179 = vadd.s32 %v173, 48
      %v180 = vadd.s32 %v173, 56
      %vm181 = vcmp.lt.s32.totalorder %v173, 0
      %v182 = vsub.s32 0, %v173
      %v183 = vsel %vm181, %v182, %v173
      %v184 = vshrl.u32 %v183, 6
      %v185 = vand.u32 %v183, 63
      %v186 = vsub.s32 0, %v185
      %v187 = vsel %vm181, %v186, %v185
      %vm188 = vcmp.lt.s32.totalorder %v174, 0
      %v189 = vsub.s32 0, %v174
      %v190 = vsel %vm188, %v189, %v174
      %v191 = vshrl.u32 %v190, 6
      %v192 = vand.u32 %v190, 63
      %v193 = vsub.s32 0, %v192
      %v194 = vsel %vm188, %v193, %v192
      %vm195 = vcmp.lt.s32.totalorder %v175, 0
      %v196 = vsub.s32 0, %v175
      %v197 = vsel %vm195, %v196, %v175
      %v198 = vshrl.u32 %v197, 6
      %v199 = vand.u32 %v197, 63
      %v200 = vsub.s32 0, %v199
      %v201 = vsel %vm195, %v200, %v199
      %vm202 = vcmp.lt.s32.totalorder %v176, 0
      %v203 = vsub.s32 0, %v176
      %v204 = vsel %vm202, %v203, %v176
      %v205 = vshrl.u32 %v204, 6
      %v206 = vand.u32 %v204, 63
      %v207 = vsub.s32 0, %v206
      %v208 = vsel %vm202, %v207, %v206
      %vm209 = vcmp.lt.s32.totalorder %v177, 0
      %v210 = vsub.s32 0, %v177
      %v211 = vsel %vm209, %v210, %v177
      %v212 = vshrl.u32 %v211, 6
      %v213 = vand.u32 %v211, 63
      %v214 = vsub.s32 0, %v213
      %v215 = vsel %vm209, %v214, %v213
      %vm216 = vcmp.lt.s32.totalorder %v178, 0
      %v217 = vsub.s32 0, %v178
      %v218 = vsel %vm216, %v217, %v178
      %v219 = vshrl.u32 %v218, 6
      %v220 = vand.u32 %v218, 63
      %v221 = vsub.s32 0, %v220
      %v222 = vsel %vm216, %v221, %v220
      %vm223 = vcmp.lt.s32.totalorder %v179, 0
      %v224 = vsub.s32 0, %v179
      %v225 = vsel %vm223, %v224, %v179
      %v226 = vshrl.u32 %v225, 6
      %v227 = vand.u32 %v225, 63
      %v228 = vsub.s32 0, %v227
      %v229 = vsel %vm223, %v228, %v227
      %vm230 = vcmp.lt.s32.totalorder %v180, 0
      %v231 = vsub.s32 0, %v180
      %v232 = vsel %vm230, %v231, %v180
      %v233 = vshrl.u32 %v232, 6
      %v234 = vand.u32 %v232, 63
      %v235 = vsub.s32 0, %v234
      %v236 = vsel %vm230, %v235, %v234
      %vm237 = vcmp.ne.s32.totalorder %v187, 0
      %vm238 = vcmp.ne.s32.totalorder %v194, 0
      %vm239 = vcmp.ne.s32.totalorder %v201, 0
      %vm240 = vcmp.ne.s32.totalorder %v208, 0
      %vm241 = vcmp.ne.s32.totalorder %v215, 0
      %vm242 = vcmp.ne.s32.totalorder %v222, 0
      %vm243 = vcmp.ne.s32.totalorder %v229, 0
      %vm244 = vcmp.ne.s32.totalorder %v236, 0
      %vm245 = vcmp.lt.s32.totalorder %v187, 0
      %vm246 = vcmp.lt.s32.totalorder %v194, 0
      %vm247 = vcmp.lt.s32.totalorder %v201, 0
      %vm248 = vcmp.lt.s32.totalorder %v208, 0
      %vm249 = vcmp.lt.s32.totalorder %v215, 0
      %vm250 = vcmp.lt.s32.totalorder %v222, 0
      %vm251 = vcmp.lt.s32.totalorder %v229, 0
      %vm252 = vcmp.lt.s32.totalorder %v236, 0
      %vm253 = vmand %vm245, %vm237
      %vm254 = vmand %vm246, %vm238
      %vm255 = vmand %vm247, %vm239
      %vm256 = vmand %vm248, %vm240
      %vm257 = vmand %vm249, %vm241
      %vm258 = vmand %vm250, %vm242
      %vm259 = vmand %vm251, %vm243
      %vm260 = vmand %vm252, %vm244
      %v261 = vadd.s32 %v187, 64
      %v262 = vadd.s32 %v194, 64
      %v263 = vadd.s32 %v201, 64
      %v264 = vadd.s32 %v208, 64
      %v265 = vadd.s32 %v215, 64
      %v266 = vadd.s32 %v222, 64
      %v267 = vadd.s32 %v229, 64
      %v268 = vadd.s32 %v236, 64
      %v269 = vsel %vm253, %v261, %v187
      %v270 = vsel %vm254, %v262, %v194
      %v271 = vsel %vm255, %v263, %v201
      %v272 = vsel %vm256, %v264, %v208
      %v273 = vsel %vm257, %v265, %v215
      %v274 = vsel %vm258, %v266, %v222
      %v275 = vsel %vm259, %v267, %v229
      %v276 = vsel %vm260, %v268, %v236
      %v277 = vld [vmem:[%s165] sm:$0xff]
      %v278 = vld [vmem:[%s165 + $0x8] sm:$0xff]
      %v279 = vld [vmem:[%s165 + $0x10] sm:$0xff]
      %v280 = vld [vmem:[%s165 + $0x18] sm:$0xff]
      %v281 = vld [vmem:[%s165 + $0x20] sm:$0xff]
      %v282 = vld [vmem:[%s165 + $0x28] sm:$0xff]
      %v283 = vld [vmem:[%s165 + $0x30] sm:$0xff]
      %v284 = vld [vmem:[%s165 + $0x38] sm:$0xff]
      %v285 = vld [vmem:[%s1] sm:$0xf]
      %v286 = vld [vmem:[%s1 + $0x4] sm:$0xf]
      %v287 = vld [vmem:[%s1 + $0x8] sm:$0xf]
      %v288 = vld [vmem:[%s1 + $0xc] sm:$0xf]
      %v289 = vpack.c.bf16 %v278, %v277
      %v290 = vpack.c.bf16 %v280, %v279
      %v291 = vpack.c.bf16 %v282, %v281
      %v292 = vpack.c.bf16 %v284, %v283
      %v293 = vld [vmem:[%s2] sm:$0x1]
      %v294 = vlaneseq
      %v295 = vshrl.u32 %v294, 7
      %v296 = vsub.s32 0, %v295
      %v297 = vrot.slane %v293, %v296
      %v302 = vunpack.c.l.b16 %v285
      %v303 = vunpack.c.l.b16 %v286
      %v304 = vunpack.c.l.b16 %v287
      %v305 = vunpack.c.l.b16 %v288
      %v306 = vpack.c.b16 %v303, %v302
      %v307 = vpack.c.b16 %v305, %v304
      %vm310 = vcmask 261120
      %v312 = vsel %vm310, %v289, 0
      %v315 = vsel %vm310, %v290, 0
      %v318 = vsel %vm310, %v291, 0
      %v321 = vsel %vm310, %v292, 0
      %323 = vmatprep.subr.bf16.mxu0 0
      %324 = vmatpush1.bf16.msra.mxu0 %v306
      %325 = vmatprep.subr.bf16.mxu0 0
      %326 = vmatpush1.bf16.msra.mxu0 %v307
      %327 = vmatprep.subr.bf16.mxu0 0
      %328 = vmatpush1.bf16.msra.mxu0 0
      %329 = vmatprep.subr.bf16.mxu0 0
      %330 = vmatpush1.bf16.msra.mxu0 0
      %331 = vmatprep.subr.bf16.mxu0 0
      %332 = vmatpush1.bf16.msra.mxu0 0
      %333 = vmatprep.subr.bf16.mxu0 0
      %334 = vmatpush1.bf16.msra.mxu0 0
      %335 = vmatprep.subr.bf16.mxu0 0
      %336 = vmatpush1.bf16.msra.mxu0 0
      %337 = vmatprep.subr.bf16.mxu0 0
      %338 = vmatpush1.bf16.msra.mxu0 0
      %339 = vmatprep.subr.bf16.mxu0 0
      %340 = vmatpush1.bf16.msra.mxu0 0
      %341 = vmatprep.subr.bf16.mxu0 0
      %342 = vmatpush1.bf16.msra.mxu0 0
      %343 = vmatprep.subr.bf16.mxu0 0
      %344 = vmatpush1.bf16.msra.mxu0 0
      %345 = vmatprep.subr.bf16.mxu0 0
      %346 = vmatpush1.bf16.msra.mxu0 0
      %347 = vmatprep.subr.bf16.mxu0 0
      %348 = vmatpush1.bf16.msra.mxu0 0
      %349 = vmatprep.subr.bf16.mxu0 0
      %350 = vmatpush1.bf16.msra.mxu0 0
      %351 = vmatprep.subr.bf16.mxu0 0
      %352 = vmatpush1.bf16.msra.mxu0 0
      %353 = vmatprep.subr.bf16.mxu0 0
      %354 = vmatpush1.bf16.msra.mxu0 0
      %355 = vmatprep.mubr.bf16.mxu0 0
      %356 = vmatmul.mubr.bf16.gmra.mrb[0].mxu0 %v312
      %v357 = vpop.f32.mrb[0].mxu0
      %v358 = vadd.f32 %v297, %v357
      %v359 = vpop.f32.mrb[0].mxu0
      %v360 = vpop.f32.mrb[0].mxu0
      %v361 = vadd.f32 %v297, %v360
      %v362 = vpop.f32.mrb[0].mxu0
      %363 = vmatprep.mubr.bf16.mxu0 0
      %364 = vmatmul.mubr.bf16.gmra.mrb[0].mxu0 %v315
      %v365 = vpop.f32.mrb[0].mxu0
      %v366 = vadd.f32 %v297, %v365
      %v367 = vpop.f32.mrb[0].mxu0
      %v368 = vpop.f32.mrb[0].mxu0
      %v369 = vadd.f32 %v297, %v368
      %v370 = vpop.f32.mrb[0].mxu0
      %371 = vmatprep.mubr.bf16.mxu0 0
      %372 = vmatmul.mubr.bf16.gmra.mrb[0].mxu0 %v318
      %v373 = vpop.f32.mrb[0].mxu0
      %v374 = vadd.f32 %v297, %v373
      %v375 = vpop.f32.mrb[0].mxu0
      %v376 = vpop.f32.mrb[0].mxu0
      %v377 = vadd.f32 %v297, %v376
      %v378 = vpop.f32.mrb[0].mxu0
      %379 = vmatprep.mubr.bf16.mxu0 0
      %380 = vmatmul.mubr.bf16.gmra.mrb[0].mxu0 %v321
      %v381 = vpop.f32.mrb[0].mxu0
      %v382 = vadd.f32 %v297, %v381
      %v383 = vpop.f32.mrb[0].mxu0
      %v384 = vpop.f32.mrb[0].mxu0
      %v385 = vadd.f32 %v297, %v384
      %v386 = vpop.f32.mrb[0].mxu0
      %387 = vdwg.mxu0
      %vm388 = vcmp.ge.s32.totalorder %v269, 1
      %vm389 = vcmp.ge.s32.totalorder %v270, 1
      %vm390 = vcmp.ge.s32.totalorder %v271, 1
      %vm391 = vcmp.ge.s32.totalorder %v272, 1
      %vm392 = vcmp.ge.s32.totalorder %v273, 1
      %vm393 = vcmp.ge.s32.totalorder %v274, 1
      %vm394 = vcmp.ge.s32.totalorder %v275, 1
      %vm395 = vcmp.ge.s32.totalorder %v276, 1
      %v396 = vrot.slane %v358, 7
      %v397 = vrot.slane %v361, 7
      %v398 = vrot.slane %v366, 7
      %v399 = vrot.slane %v369, 7
      %v400 = vrot.slane %v374, 7
      %v401 = vrot.slane %v377, 7
      %v402 = vrot.slane %v382, 7
      %v403 = vrot.slane %v385, 7
      %vm404 = vcmp.lt.s32.totalorder %v173, 1
      %v405 = vsel %vm404, %v402, %v403
      %v406 = vsel %vm404, %v401, %v402
      %v407 = vsel %vm404, %v400, %v401
      %v408 = vsel %vm404, %v399, %v400
      %v409 = vsel %vm404, %v398, %v399
      %v410 = vsel %vm404, %v397, %v398
      %v411 = vsel %vm404, %v396, %v397
      %v412 = vsel %vm404, %v403, %v396
      %v413 = vsel %vm388, 1, 0
      %v414 = vsel %vm389, 1, 0
      %v415 = vsel %vm390, 1, 0
      %v416 = vsel %vm391, 1, 0
      %v417 = vsel %vm392, 1, 0
      %v418 = vsel %vm393, 1, 0
      %v419 = vsel %vm394, 1, 0
      %v420 = vsel %vm395, 1, 0
      %vm421 = vcmp.eq.s32.totalorder %v413, 1
      %vm422 = vcmp.eq.s32.totalorder %v414, 1
      %vm423 = vcmp.eq.s32.totalorder %v415, 1
      %vm424 = vcmp.eq.s32.totalorder %v416, 1
      %vm425 = vcmp.eq.s32.totalorder %v417, 1
      %vm426 = vcmp.eq.s32.totalorder %v418, 1
      %vm427 = vcmp.eq.s32.totalorder %v419, 1
      %vm428 = vcmp.eq.s32.totalorder %v420, 1
      %v429 = vsel %vm421, %v412, 0.0
      %v430 = vsel %vm422, %v411, 0.0
      %v431 = vsel %vm423, %v410, 0.0
      %v432 = vsel %vm424, %v409, 0.0
      %v433 = vsel %vm425, %v408, 0.0
      %v434 = vsel %vm426, %v407, 0.0
      %v435 = vsel %vm427, %v406, 0.0
      %v436 = vsel %vm428, %v405, 0.0
      %vm437 = vcmp.ge.s32.totalorder %v269, 2
      %vm438 = vcmp.ge.s32.totalorder %v270, 2
      %vm439 = vcmp.ge.s32.totalorder %v271, 2
      %vm440 = vcmp.ge.s32.totalorder %v272, 2
      %vm441 = vcmp.ge.s32.totalorder %v273, 2
      %vm442 = vcmp.ge.s32.totalorder %v274, 2
      %vm443 = vcmp.ge.s32.totalorder %v275, 2
      %vm444 = vcmp.ge.s32.totalorder %v276, 2
      %v445 = vrot.slane %v358, 6
      %v446 = vrot.slane %v361, 6
      %v447 = vrot.slane %v366, 6
      %v448 = vrot.slane %v369, 6
      %v449 = vrot.slane %v374, 6
      %v450 = vrot.slane %v377, 6
      %v451 = vrot.slane %v382, 6
      %v452 = vrot.slane %v385, 6
      %vm453 = vcmp.lt.s32.totalorder %v173, 2
      %v454 = vsel %vm453, %v451, %v452
      %v455 = vsel %vm453, %v450, %v451
      %v456 = vsel %vm453, %v449, %v450
      %v457 = vsel %vm453, %v448, %v449
      %v458 = vsel %vm453, %v447, %v448
      %v459 = vsel %vm453, %v446, %v447
      %v460 = vsel %vm453, %v445, %v446
      %v461 = vsel %vm453, %v452, %v445
      %v462 = vsel %vm437, 1, 0
      %v463 = vsel %vm438, 1, 0
      %v464 = vsel %vm439, 1, 0
      %v465 = vsel %vm440, 1, 0
      %v466 = vsel %vm441, 1, 0
      %v467 = vsel %vm442, 1, 0
      %v468 = vsel %vm443, 1, 0
      %v469 = vsel %vm444, 1, 0
      %vm470 = vcmp.eq.s32.totalorder %v462, 1
      %vm471 = vcmp.eq.s32.totalorder %v463, 1
      %vm472 = vcmp.eq.s32.totalorder %v464, 1
      %vm473 = vcmp.eq.s32.totalorder %v465, 1
      %vm474 = vcmp.eq.s32.totalorder %v466, 1
      %vm475 = vcmp.eq.s32.totalorder %v467, 1
      %vm476 = vcmp.eq.s32.totalorder %v468, 1
      %vm477 = vcmp.eq.s32.totalorder %v469, 1
      %v478 = vsel %vm470, %v461, 0.0
      %v479 = vsel %vm471, %v460, 0.0
      %v480 = vsel %vm472, %v459, 0.0
      %v481 = vsel %vm473, %v458, 0.0
      %v482 = vsel %vm474, %v457, 0.0
      %v483 = vsel %vm475, %v456, 0.0
      %v484 = vsel %vm476, %v455, 0.0
      %v485 = vsel %vm477, %v454, 0.0
      %v486 = vld [vmem:[%s2 + $0x2] sm:$0x7]
      %v487 = vlaneseq
      %v488 = vshrl.u32 %v487, 7
      %v489 = vsub.s32 0, %v488
      %v490 = vrot.slane %v486, %v489
      %v491 = vmul.f32 %v490, %v478
      %v492 = vmul.f32 %v490, %v479
      %v493 = vmul.f32 %v490, %v480
      %v494 = vmul.f32 %v490, %v481
      %v495 = vmul.f32 %v490, %v482
      %v496 = vmul.f32 %v490, %v483
      %v497 = vmul.f32 %v490, %v484
      %v498 = vmul.f32 %v490, %v485
      %v499 = vlaneseq
      %v500 = vshrl.u32 %v499, 7
      %v501 = vsub.s32 1, %v500
      %v502 = vrot.slane %v486, %v501
      %v503 = vmul.f32 %v502, %v429
      %v504 = vmul.f32 %v502, %v430
      %v505 = vmul.f32 %v502, %v431
      %v506 = vmul.f32 %v502, %v432
      %v507 = vmul.f32 %v502, %v433
      %v508 = vmul.f32 %v502, %v434
      %v509 = vmul.f32 %v502, %v435
      %v510 = vmul.f32 %v502, %v436
      %v511 = vadd.f32 %v491, %v503
      %v512 = vadd.f32 %v492, %v504
      %v513 = vadd.f32 %v493, %v505
      %v514 = vadd.f32 %v494, %v506
      %v515 = vadd.f32 %v495, %v507
      %v516 = vadd.f32 %v496, %v508
      %v517 = vadd.f32 %v497, %v509
      %v518 = vadd.f32 %v498, %v510
      %v519 = vlaneseq
      %v520 = vshrl.u32 %v519, 7
      %v521 = vsub.s32 2, %v520
      %v522 = vrot.slane %v486, %v521
      %v523 = vmul.f32 %v522, %v358
      %v524 = vmul.f32 %v522, %v361
      %v525 = vmul.f32 %v522, %v366
      %v526 = vmul.f32 %v522, %v369
      %v527 = vmul.f32 %v522, %v374
      %v528 = vmul.f32 %v522, %v377
      %v529 = vmul.f32 %v522, %v382
      %v530 = vmul.f32 %v522, %v385
      %v531 = vadd.f32 %v511, %v523
      %v532 = vadd.f32 %v512, %v524
      %v533 = vadd.f32 %v513, %v525
      %v534 = vadd.f32 %v514, %v526
      %v535 = vadd.f32 %v515, %v527
      %v536 = vadd.f32 %v516, %v528
      %v537 = vadd.f32 %v517, %v529
      %v538 = vadd.f32 %v518, %v530
      %v539 = vld [vmem:[%s2 + $0x1] sm:$0x1]
      %v540 = vlaneseq
      %v541 = vshrl.u32 %v540, 7
      %v542 = vsub.s32 0, %v541
      %v543 = vrot.slane %v539, %v542
      %v544 = vadd.f32 %v531, %v543
      %v545 = vadd.f32 %v532, %v543
      %v546 = vadd.f32 %v533, %v543
      %v547 = vadd.f32 %v534, %v543
      %v548 = vadd.f32 %v535, %v543
      %v549 = vadd.f32 %v536, %v543
      %v550 = vadd.f32 %v537, %v543
      %v551 = vadd.f32 %v538, %v543
      %560 = vrot.lane.b32.xlu0 %v544, 32
      %v561 = vpop.permute.xlu0 %560
      %562 = vrot.lane.b32.xlu0 %v545, 32
      %v563 = vpop.permute.xlu0 %562
      %564 = vrot.lane.b32.xlu0 %v546, 32
      %v565 = vpop.permute.xlu0 %564
      %566 = vrot.lane.b32.xlu0 %v547, 32
      %v567 = vpop.permute.xlu0 %566
      %568 = vrot.lane.b32.xlu0 %v548, 32
      %v569 = vpop.permute.xlu0 %568
      %570 = vrot.lane.b32.xlu0 %v549, 32
      %v571 = vpop.permute.xlu0 %570
      %572 = vrot.lane.b32.xlu0 %v550, 32
      %v573 = vpop.permute.xlu0 %572
      %574 = vrot.lane.b32.xlu0 %v551, 32
      %v575 = vpop.permute.xlu0 %574
      %v584 = vmul.f32 %v544, %v561
      %v585 = vmul.f32 %v545, %v563
      %v586 = vmul.f32 %v546, %v565
      %v587 = vmul.f32 %v547, %v567
      %v588 = vmul.f32 %v548, %v569
      %v589 = vmul.f32 %v549, %v571
      %v590 = vmul.f32 %v550, %v573
      %v591 = vmul.f32 %v551, %v575
      %592 = vst [vmem:[#allocation2] sm:$0xff] 0.0
      %593 = vst [vmem:[#allocation2 + $0x8] sm:$0xff] 0.0
      %594 = vst [vmem:[#allocation2 + $0x10] sm:$0xff] 0.0
      %595 = vst [vmem:[#allocation2 + $0x18] sm:$0xff] 0.0
      %596 = vst [vmem:[#allocation2 + $0x20] sm:$0xff] 0.0
      %597 = vst [vmem:[#allocation2 + $0x28] sm:$0xff] 0.0
      %598 = vst [vmem:[#allocation2 + $0x30] sm:$0xff] 0.0
      %599 = vst [vmem:[#allocation2 + $0x38] sm:$0xff] 0.0
      %608 = vrot.lane.b32.xlu0 %v584, 64
      %v609 = vpop.permute.xlu0 %608
      %610 = vrot.lane.b32.xlu0 %v585, 64
      %v611 = vpop.permute.xlu0 %610
      %612 = vrot.lane.b32.xlu0 %v586, 64
      %v613 = vpop.permute.xlu0 %612
      %614 = vrot.lane.b32.xlu0 %v587, 64
      %v615 = vpop.permute.xlu0 %614
      %616 = vrot.lane.b32.xlu0 %v588, 64
      %v617 = vpop.permute.xlu0 %616
      %618 = vrot.lane.b32.xlu0 %v589, 64
      %v619 = vpop.permute.xlu0 %618
      %620 = vrot.lane.b32.xlu0 %v590, 64
      %v621 = vpop.permute.xlu0 %620
      %622 = vrot.lane.b32.xlu0 %v591, 64
      %v623 = vpop.permute.xlu0 %622
      %632 = vst.msk [vmem:[#allocation2 + $0x40] sm:$0xff] %vm310, %v609
      %633 = vst.msk [vmem:[#allocation2 + $0x48] sm:$0xff] %vm310, %v611
      %634 = vst.msk [vmem:[#allocation2 + $0x50] sm:$0xff] %vm310, %v613
      %635 = vst.msk [vmem:[#allocation2 + $0x58] sm:$0xff] %vm310, %v615
      %636 = vst.msk [vmem:[#allocation2 + $0x60] sm:$0xff] %vm310, %v617
      %637 = vst.msk [vmem:[#allocation2 + $0x68] sm:$0xff] %vm310, %v619
      %638 = vst.msk [vmem:[#allocation2 + $0x70] sm:$0xff] %vm310, %v621
      %639 = vst.msk [vmem:[#allocation2 + $0x78] sm:$0xff] %vm310, %v623
      %640 = vrot.lane.b32.xlu0 %v584, 96
      %v641 = vpop.permute.xlu0 %640
      %642 = vrot.lane.b32.xlu0 %v585, 96
      %v643 = vpop.permute.xlu0 %642
      %644 = vrot.lane.b32.xlu0 %v586, 96
      %v645 = vpop.permute.xlu0 %644
      %646 = vrot.lane.b32.xlu0 %v587, 96
      %v647 = vpop.permute.xlu0 %646
      %648 = vrot.lane.b32.xlu0 %v588, 96
      %v649 = vpop.permute.xlu0 %648
      %650 = vrot.lane.b32.xlu0 %v589, 96
      %v651 = vpop.permute.xlu0 %650
      %652 = vrot.lane.b32.xlu0 %v590, 96
      %v653 = vpop.permute.xlu0 %652
      %654 = vrot.lane.b32.xlu0 %v591, 96
      %v655 = vpop.permute.xlu0 %654
      %vm664 = vcmask 523520
      %665 = vst.msk [vmem:[#allocation2 + $0x40] sm:$0xff] %vm664, %v641
      %666 = vst.msk [vmem:[#allocation2 + $0x48] sm:$0xff] %vm664, %v643
      %667 = vst.msk [vmem:[#allocation2 + $0x50] sm:$0xff] %vm664, %v645
      %668 = vst.msk [vmem:[#allocation2 + $0x58] sm:$0xff] %vm664, %v647
      %669 = vst.msk [vmem:[#allocation2 + $0x60] sm:$0xff] %vm664, %v649
      %670 = vst.msk [vmem:[#allocation2 + $0x68] sm:$0xff] %vm664, %v651
      %671 = vst.msk [vmem:[#allocation2 + $0x70] sm:$0xff] %vm664, %v653
      %672 = vst.msk [vmem:[#allocation2 + $0x78] sm:$0xff] %vm664, %v655
      %vm673 = vcmask 785920
      %674 = vst.msk [vmem:[#allocation2 + $0x40] sm:$0xff] %vm673, %v584
      %675 = vst.msk [vmem:[#allocation2 + $0x48] sm:$0xff] %vm673, %v585
      %676 = vst.msk [vmem:[#allocation2 + $0x50] sm:$0xff] %vm673, %v586
      %677 = vst.msk [vmem:[#allocation2 + $0x58] sm:$0xff] %vm673, %v587
      %678 = vst.msk [vmem:[#allocation2 + $0x60] sm:$0xff] %vm673, %v588
      %679 = vst.msk [vmem:[#allocation2 + $0x68] sm:$0xff] %vm673, %v589
      %680 = vst.msk [vmem:[#allocation2 + $0x70] sm:$0xff] %vm673, %v590
      %681 = vst.msk [vmem:[#allocation2 + $0x78] sm:$0xff] %vm673, %v591
      %682 = vrot.lane.b32.xlu0 %v584, 32
      %v683 = vpop.permute.xlu0 %682
      %684 = vrot.lane.b32.xlu0 %v585, 32
      %v685 = vpop.permute.xlu0 %684
      %686 = vrot.lane.b32.xlu0 %v586, 32
      %v687 = vpop.permute.xlu0 %686
      %688 = vrot.lane.b32.xlu0 %v587, 32
      %v689 = vpop.permute.xlu0 %688
      %690 = vrot.lane.b32.xlu0 %v588, 32
      %v691 = vpop.permute.xlu0 %690
      %692 = vrot.lane.b32.xlu0 %v589, 32
      %v693 = vpop.permute.xlu0 %692
      %694 = vrot.lane.b32.xlu0 %v590, 32
      %v695 = vpop.permute.xlu0 %694
      %696 = vrot.lane.b32.xlu0 %v591, 32
      %v697 = vpop.permute.xlu0 %696
      %vm706 = vcmask 1048320
      %707 = vst.msk [vmem:[#allocation2 + $0x40] sm:$0xff] %vm706, %v683
      %708 = vst.msk [vmem:[#allocation2 + $0x48] sm:$0xff] %vm706, %v685
      %709 = vst.msk [vmem:[#allocation2 + $0x50] sm:$0xff] %vm706, %v687
      %710 = vst.msk [vmem:[#allocation2 + $0x58] sm:$0xff] %vm706, %v689
      %711 = vst.msk [vmem:[#allocation2 + $0x60] sm:$0xff] %vm706, %v691
      %712 = vst.msk [vmem:[#allocation2 + $0x68] sm:$0xff] %vm706, %v693
      %713 = vst.msk [vmem:[#allocation2 + $0x70] sm:$0xff] %vm706, %v695
      %714 = vst.msk [vmem:[#allocation2 + $0x78] sm:$0xff] %vm706, %v697
      %v715 = vld [vmem:[%s2 + $0x5] sm:$0x1]
      %v716 = vld [vmem:[#allocation2 + $0x40] sm:$0xff]
      %v717 = vld [vmem:[#allocation2 + $0x48] sm:$0xff]
      %v718 = vld [vmem:[#allocation2 + $0x50] sm:$0xff]
      %v719 = vld [vmem:[#allocation2 + $0x58] sm:$0xff]
      %v720 = vld [vmem:[#allocation2 + $0x60] sm:$0xff]
      %v721 = vld [vmem:[#allocation2 + $0x68] sm:$0xff]
      %v722 = vld [vmem:[#allocation2 + $0x70] sm:$0xff]
      %v723 = vld [vmem:[#allocation2 + $0x78] sm:$0xff]
      %v724 = vlaneseq
      %v725 = vshrl.u32 %v724, 7
      %v726 = vsub.s32 0, %v725
      %v727 = vrot.slane %v715, %v726
      %v728 = vmul.f32 %v727, %v716
      %v729 = vmul.f32 %v727, %v717
      %v730 = vmul.f32 %v727, %v718
      %v731 = vmul.f32 %v727, %v719
      %v732 = vmul.f32 %v727, %v720
      %v733 = vmul.f32 %v727, %v721
      %v734 = vmul.f32 %v727, %v722
      %v735 = vmul.f32 %v727, %v723
      %v736 = vld [vmem:[%s2 + $0x8] sm:$0x1]
      %v737 = vlaneseq
      %v738 = vshrl.u32 %v737, 7
      %v739 = vsub.s32 0, %v738
      %v740 = vrot.slane %v736, %v739
      %v741 = vmul.f32 %v740, %v716
      %v742 = vmul.f32 %v740, %v717
      %v743 = vmul.f32 %v740, %v718
      %v744 = vmul.f32 %v740, %v719
      %v745 = vmul.f32 %v740, %v720
      %v746 = vmul.f32 %v740, %v721
      %v747 = vmul.f32 %v740, %v722
      %v748 = vmul.f32 %v740, %v723
      %v749 = vld [vmem:[%s2 + $0x9] sm:$0x1]
      %v750 = vld [vmem:[#allocation2 + $0x38] sm:$0xff]
      %v751 = vld [vmem:[#allocation2 + $0x40] sm:$0xff]
      %v752 = vld [vmem:[#allocation2 + $0x48] sm:$0xff]
      %v753 = vld [vmem:[#allocation2 + $0x50] sm:$0xff]
      %v754 = vld [vmem:[#allocation2 + $0x58] sm:$0xff]
      %v755 = vld [vmem:[#allocation2 + $0x60] sm:$0xff]
      %v756 = vld [vmem:[#allocation2 + $0x68] sm:$0xff]
      %v757 = vld [vmem:[#allocation2 + $0x70] sm:$0xff]
      %v758 = vlaneseq
      %v759 = vshrl.u32 %v758, 7
      %v760 = vsub.s32 0, %v759
      %v761 = vrot.slane %v749, %v760
      %v762 = vmul.f32 %v761, %v750
      %v763 = vmul.f32 %v761, %v751
      %v764 = vmul.f32 %v761, %v752
      %v765 = vmul.f32 %v761, %v753
      %v766 = vmul.f32 %v761, %v754
      %v767 = vmul.f32 %v761, %v755
      %v768 = vmul.f32 %v761, %v756
      %v769 = vmul.f32 %v761, %v757
      %v770 = vadd.f32 %v741, %v762
      %v771 = vadd.f32 %v742, %v763
      %v772 = vadd.f32 %v743, %v764
      %v773 = vadd.f32 %v744, %v765
      %v774 = vadd.f32 %v745, %v766
      %v775 = vadd.f32 %v746, %v767
      %v776 = vadd.f32 %v747, %v768
      %v777 = vadd.f32 %v748, %v769
      %v778 = vld [vmem:[%s2 + $0xa] sm:$0x1]
      %v779 = vld [vmem:[#allocation2 + $0x30] sm:$0xff]
      %v780 = vlaneseq
      %v781 = vshrl.u32 %v780, 7
      %v782 = vsub.s32 0, %v781
      %v783 = vrot.slane %v778, %v782
      %v784 = vmul.f32 %v783, %v779
      %v785 = vmul.f32 %v783, %v750
      %v786 = vmul.f32 %v783, %v751
      %v787 = vmul.f32 %v783, %v752
      %v788 = vmul.f32 %v783, %v753
      %v789 = vmul.f32 %v783, %v754
      %v790 = vmul.f32 %v783, %v755
      %v791 = vmul.f32 %v783, %v756
      %v792 = vadd.f32 %v770, %v784
      %v793 = vadd.f32 %v771, %v785
      %v794 = vadd.f32 %v772, %v786
      %v795 = vadd.f32 %v773, %v787
      %v796 = vadd.f32 %v774, %v788
      %v797 = vadd.f32 %v775, %v789
      %v798 = vadd.f32 %v776, %v790
      %v799 = vadd.f32 %v777, %v791
      %v800 = vld [vmem:[%s2 + $0xb] sm:$0x1]
      %v801 = vld [vmem:[#allocation2 + $0x28] sm:$0xff]
      %v802 = vlaneseq
      %v803 = vshrl.u32 %v802, 7
      %v804 = vsub.s32 0, %v803
      %v805 = vrot.slane %v800, %v804
      %v806 = vmul.f32 %v805, %v801
      %v807 = vmul.f32 %v805, %v779
      %v808 = vmul.f32 %v805, %v750
      %v809 = vmul.f32 %v805, %v751
      %v810 = vmul.f32 %v805, %v752
      %v811 = vmul.f32 %v805, %v753
      %v812 = vmul.f32 %v805, %v754
      %v813 = vmul.f32 %v805, %v755
      %v814 = vadd.f32 %v792, %v806
      %v815 = vadd.f32 %v793, %v807
      %v816 = vadd.f32 %v794, %v808
      %v817 = vadd.f32 %v795, %v809
      %v818 = vadd.f32 %v796, %v810
      %v819 = vadd.f32 %v797, %v811
      %v820 = vadd.f32 %v798, %v812
      %v821 = vadd.f32 %v799, %v813
      %v822 = vld [vmem:[%s2 + $0xc] sm:$0x1]
      %v823 = vld [vmem:[#allocation2 + $0x20] sm:$0xff]
      %v824 = vlaneseq
      %v825 = vshrl.u32 %v824, 7
      %v826 = vsub.s32 0, %v825
      %v827 = vrot.slane %v822, %v826
      %v828 = vmul.f32 %v827, %v823
      %v829 = vmul.f32 %v827, %v801
      %v830 = vmul.f32 %v827, %v779
      %v831 = vmul.f32 %v827, %v750
      %v832 = vmul.f32 %v827, %v751
      %v833 = vmul.f32 %v827, %v752
      %v834 = vmul.f32 %v827, %v753
      %v835 = vmul.f32 %v827, %v754
      %v836 = vadd.f32 %v814, %v828
      %v837 = vadd.f32 %v815, %v829
      %v838 = vadd.f32 %v816, %v830
      %v839 = vadd.f32 %v817, %v831
      %v840 = vadd.f32 %v818, %v832
      %v841 = vadd.f32 %v819, %v833
      %v842 = vadd.f32 %v820, %v834
      %v843 = vadd.f32 %v821, %v835
      %v844 = vld [vmem:[%s2 + $0xd] sm:$0x1]
      %v845 = vld [vmem:[#allocation2 + $0x18] sm:$0xff]
      %v846 = vlaneseq
      %v847 = vshrl.u32 %v846, 7
      %v848 = vsub.s32 0, %v847
      %v849 = vrot.slane %v844, %v848
      %v850 = vmul.f32 %v849, %v845
      %v851 = vmul.f32 %v849, %v823
      %v852 = vmul.f32 %v849, %v801
      %v853 = vmul.f32 %v849, %v779
      %v854 = vmul.f32 %v849, %v750
      %v855 = vmul.f32 %v849, %v751
      %v856 = vmul.f32 %v849, %v752
      %v857 = vmul.f32 %v849, %v753
      %v858 = vadd.f32 %v836, %v850
      %v859 = vadd.f32 %v837, %v851
      %v860 = vadd.f32 %v838, %v852
      %v861 = vadd.f32 %v839, %v853
      %v862 = vadd.f32 %v840, %v854
      %v863 = vadd.f32 %v841, %v855
      %v864 = vadd.f32 %v842, %v856
      %v865 = vadd.f32 %v843, %v857
      %v866 = vld [vmem:[%s2 + $0xe] sm:$0x1]
      %v867 = vld [vmem:[#allocation2 + $0x10] sm:$0xff]
      %v868 = vlaneseq
      %v869 = vshrl.u32 %v868, 7
      %v870 = vsub.s32 0, %v869
      %v871 = vrot.slane %v866, %v870
      %v872 = vmul.f32 %v871, %v867
      %v873 = vmul.f32 %v871, %v845
      %v874 = vmul.f32 %v871, %v823
      %v875 = vmul.f32 %v871, %v801
      %v876 = vmul.f32 %v871, %v779
      %v877 = vmul.f32 %v871, %v750
      %v878 = vmul.f32 %v871, %v751
      %v879 = vmul.f32 %v871, %v752
      %v880 = vadd.f32 %v858, %v872
      %v881 = vadd.f32 %v859, %v873
      %v882 = vadd.f32 %v860, %v874
      %v883 = vadd.f32 %v861, %v875
      %v884 = vadd.f32 %v862, %v876
      %v885 = vadd.f32 %v863, %v877
      %v886 = vadd.f32 %v864, %v878
      %v887 = vadd.f32 %v865, %v879
      %v888 = vld [vmem:[%s2 + $0xf] sm:$0x1]
      %v889 = vld [vmem:[#allocation2 + $0x8] sm:$0xff]
      %v890 = vlaneseq
      %v891 = vshrl.u32 %v890, 7
      %v892 = vsub.s32 0, %v891
      %v893 = vrot.slane %v888, %v892
      %v894 = vmul.f32 %v893, %v889
      %v895 = vmul.f32 %v893, %v867
      %v896 = vmul.f32 %v893, %v845
      %v897 = vmul.f32 %v893, %v823
      %v898 = vmul.f32 %v893, %v801
      %v899 = vmul.f32 %v893, %v779
      %v900 = vmul.f32 %v893, %v750
      %v901 = vmul.f32 %v893, %v751
      %v902 = vadd.f32 %v880, %v894
      %v903 = vadd.f32 %v881, %v895
      %v904 = vadd.f32 %v882, %v896
      %v905 = vadd.f32 %v883, %v897
      %v906 = vadd.f32 %v884, %v898
      %v907 = vadd.f32 %v885, %v899
      %v908 = vadd.f32 %v886, %v900
      %v909 = vadd.f32 %v887, %v901
      %v910 = vadd.f32 %v728, %v902
      %v911 = vadd.f32 %v729, %v903
      %v912 = vadd.f32 %v730, %v904
      %v913 = vadd.f32 %v731, %v905
      %v914 = vadd.f32 %v732, %v906
      %v915 = vadd.f32 %v733, %v907
      %v916 = vadd.f32 %v734, %v908
      %v917 = vadd.f32 %v735, %v909
      %vm918 = vcmp.ge.s32.totalorder %v173, 1
      %vm919 = vcmp.ge.s32.totalorder %v174, 1
      %vm920 = vcmp.ge.s32.totalorder %v175, 1
      %vm921 = vcmp.ge.s32.totalorder %v176, 1
      %vm922 = vcmp.ge.s32.totalorder %v177, 1
      %vm923 = vcmp.ge.s32.totalorder %v178, 1
      %vm924 = vcmp.ge.s32.totalorder %v179, 1
      %vm925 = vcmp.ge.s32.totalorder %v180, 1
      %934 = vrot.lane.b32.xlu0 %v902, 96
      %v935 = vpop.permute.xlu0 %934
      %936 = vrot.lane.b32.xlu0 %v903, 96
      %v937 = vpop.permute.xlu0 %936
      %938 = vrot.lane.b32.xlu0 %v904, 96
      %v939 = vpop.permute.xlu0 %938
      %940 = vrot.lane.b32.xlu0 %v905, 96
      %v941 = vpop.permute.xlu0 %940
      %942 = vrot.lane.b32.xlu0 %v906, 96
      %v943 = vpop.permute.xlu0 %942
      %944 = vrot.lane.b32.xlu0 %v907, 96
      %v945 = vpop.permute.xlu0 %944
      %946 = vrot.lane.b32.xlu0 %v908, 96
      %v947 = vpop.permute.xlu0 %946
      %948 = vrot.lane.b32.xlu0 %v909, 96
      %v949 = vpop.permute.xlu0 %948
      %v958 = vrot.slane %v935, 7
      %v959 = vrot.slane %v937, 7
      %v960 = vrot.slane %v939, 7
      %v961 = vrot.slane %v941, 7
      %v962 = vrot.slane %v943, 7
      %v963 = vrot.slane %v945, 7
      %v964 = vrot.slane %v947, 7
      %v965 = vrot.slane %v949, 7
      %v966 = vsel %vm404, %v964, %v965
      %v967 = vsel %vm404, %v963, %v964
      %v968 = vsel %vm404, %v962, %v963
      %v969 = vsel %vm404, %v961, %v962
      %v970 = vsel %vm404, %v960, %v961
      %v971 = vsel %vm404, %v959, %v960
      %v972 = vsel %vm404, %v958, %v959
      %v973 = vsel %vm404, %v965, %v958
      %v974 = vsel %vm918, 1, 0
      %v975 = vsel %vm919, 1, 0
      %v976 = vsel %vm920, 1, 0
      %v977 = vsel %vm921, 1, 0
      %v978 = vsel %vm922, 1, 0
      %v979 = vsel %vm923, 1, 0
      %v980 = vsel %vm924, 1, 0
      %v981 = vsel %vm925, 1, 0
      %vm982 = vcmp.eq.s32.totalorder %v974, 1
      %vm983 = vcmp.eq.s32.totalorder %v975, 1
      %vm984 = vcmp.eq.s32.totalorder %v976, 1
      %vm985 = vcmp.eq.s32.totalorder %v977, 1
      %vm986 = vcmp.eq.s32.totalorder %v978, 1
      %vm987 = vcmp.eq.s32.totalorder %v979, 1
      %vm988 = vcmp.eq.s32.totalorder %v980, 1
      %vm989 = vcmp.eq.s32.totalorder %v981, 1
      %v990 = vsel %vm982, %v973, 0.0
      %v991 = vsel %vm983, %v972, 0.0
      %v992 = vsel %vm984, %v971, 0.0
      %v993 = vsel %vm985, %v970, 0.0
      %v994 = vsel %vm986, %v969, 0.0
      %v995 = vsel %vm987, %v968, 0.0
      %v996 = vsel %vm988, %v967, 0.0
      %v997 = vsel %vm989, %v966, 0.0
      %v998 = vadd.f32 %v910, %v990
      %v999 = vadd.f32 %v911, %v991
      %v1000 = vadd.f32 %v912, %v992
      %v1001 = vadd.f32 %v913, %v993
      %v1002 = vadd.f32 %v914, %v994
      %v1003 = vadd.f32 %v915, %v995
      %v1004 = vadd.f32 %v916, %v996
      %v1005 = vadd.f32 %v917, %v997
      %vm1006 = vcmp.ge.s32.totalorder %v173, 2
      %vm1007 = vcmp.ge.s32.totalorder %v174, 2
      %vm1008 = vcmp.ge.s32.totalorder %v175, 2
      %vm1009 = vcmp.ge.s32.totalorder %v176, 2
      %vm1010 = vcmp.ge.s32.totalorder %v177, 2
      %vm1011 = vcmp.ge.s32.totalorder %v178, 2
      %vm1012 = vcmp.ge.s32.totalorder %v179, 2
      %vm1013 = vcmp.ge.s32.totalorder %v180, 2
      %1014 = vrot.lane.b32.xlu0 %v902, 64
      %v1015 = vpop.permute.xlu0 %1014
      %1016 = vrot.lane.b32.xlu0 %v903, 64
      %v1017 = vpop.permute.xlu0 %1016
      %1018 = vrot.lane.b32.xlu0 %v904, 64
      %v1019 = vpop.permute.xlu0 %1018
      %1020 = vrot.lane.b32.xlu0 %v905, 64
      %v1021 = vpop.permute.xlu0 %1020
      %1022 = vrot.lane.b32.xlu0 %v906, 64
      %v1023 = vpop.permute.xlu0 %1022
      %1024 = vrot.lane.b32.xlu0 %v907, 64
      %v1025 = vpop.permute.xlu0 %1024
      %1026 = vrot.lane.b32.xlu0 %v908, 64
      %v1027 = vpop.permute.xlu0 %1026
      %1028 = vrot.lane.b32.xlu0 %v909, 64
      %v1029 = vpop.permute.xlu0 %1028
      %v1038 = vrot.slane %v1015, 6
      %v1039 = vrot.slane %v1017, 6
      %v1040 = vrot.slane %v1019, 6
      %v1041 = vrot.slane %v1021, 6
      %v1042 = vrot.slane %v1023, 6
      %v1043 = vrot.slane %v1025, 6
      %v1044 = vrot.slane %v1027, 6
      %v1045 = vrot.slane %v1029, 6
      %v1046 = vsel %vm453, %v1044, %v1045
      %v1047 = vsel %vm453, %v1043, %v1044
      %v1048 = vsel %vm453, %v1042, %v1043
      %v1049 = vsel %vm453, %v1041, %v1042
      %v1050 = vsel %vm453, %v1040, %v1041
      %v1051 = vsel %vm453, %v1039, %v1040
      %v1052 = vsel %vm453, %v1038, %v1039
      %v1053 = vsel %vm453, %v1045, %v1038
      %v1054 = vsel %vm1006, 1, 0
      %v1055 = vsel %vm1007, 1, 0
      %v1056 = vsel %vm1008, 1, 0
      %v1057 = vsel %vm1009, 1, 0
      %v1058 = vsel %vm1010, 1, 0
      %v1059 = vsel %vm1011, 1, 0
      %v1060 = vsel %vm1012, 1, 0
      %v1061 = vsel %vm1013, 1, 0
      %vm1062 = vcmp.eq.s32.totalorder %v1054, 1
      %vm1063 = vcmp.eq.s32.totalorder %v1055, 1
      %vm1064 = vcmp.eq.s32.totalorder %v1056, 1
      %vm1065 = vcmp.eq.s32.totalorder %v1057, 1
      %vm1066 = vcmp.eq.s32.totalorder %v1058, 1
      %vm1067 = vcmp.eq.s32.totalorder %v1059, 1
      %vm1068 = vcmp.eq.s32.totalorder %v1060, 1
      %vm1069 = vcmp.eq.s32.totalorder %v1061, 1
      %v1070 = vsel %vm1062, %v1053, 0.0
      %v1071 = vsel %vm1063, %v1052, 0.0
      %v1072 = vsel %vm1064, %v1051, 0.0
      %v1073 = vsel %vm1065, %v1050, 0.0
      %v1074 = vsel %vm1066, %v1049, 0.0
      %v1075 = vsel %vm1067, %v1048, 0.0
      %v1076 = vsel %vm1068, %v1047, 0.0
      %v1077 = vsel %vm1069, %v1046, 0.0
      %v1078 = vadd.f32 %v998, %v1070
      %v1079 = vadd.f32 %v999, %v1071
      %v1080 = vadd.f32 %v1000, %v1072
      %v1081 = vadd.f32 %v1001, %v1073
      %v1082 = vadd.f32 %v1002, %v1074
      %v1083 = vadd.f32 %v1003, %v1075
      %v1084 = vadd.f32 %v1004, %v1076
      %v1085 = vadd.f32 %v1005, %v1077
      %vm1086 = vcmp.ge.s32.totalorder %v173, 3
      %vm1087 = vcmp.ge.s32.totalorder %v174, 3
      %vm1088 = vcmp.ge.s32.totalorder %v175, 3
      %vm1089 = vcmp.ge.s32.totalorder %v176, 3
      %vm1090 = vcmp.ge.s32.totalorder %v177, 3
      %vm1091 = vcmp.ge.s32.totalorder %v178, 3
      %vm1092 = vcmp.ge.s32.totalorder %v179, 3
      %vm1093 = vcmp.ge.s32.totalorder %v180, 3
      %1094 = vrot.lane.b32.xlu0 %v902, 32
      %v1095 = vpop.permute.xlu0 %1094
      %1096 = vrot.lane.b32.xlu0 %v903, 32
      %v1097 = vpop.permute.xlu0 %1096
      %1098 = vrot.lane.b32.xlu0 %v904, 32
      %v1099 = vpop.permute.xlu0 %1098
      %1100 = vrot.lane.b32.xlu0 %v905, 32
      %v1101 = vpop.permute.xlu0 %1100
      %1102 = vrot.lane.b32.xlu0 %v906, 32
      %v1103 = vpop.permute.xlu0 %1102
      %1104 = vrot.lane.b32.xlu0 %v907, 32
      %v1105 = vpop.permute.xlu0 %1104
      %1106 = vrot.lane.b32.xlu0 %v908, 32
      %v1107 = vpop.permute.xlu0 %1106
      %1108 = vrot.lane.b32.xlu0 %v909, 32
      %v1109 = vpop.permute.xlu0 %1108
      %v1118 = vrot.slane %v1095, 5
      %v1119 = vrot.slane %v1097, 5
      %v1120 = vrot.slane %v1099, 5
      %v1121 = vrot.slane %v1101, 5
      %v1122 = vrot.slane %v1103, 5
      %v1123 = vrot.slane %v1105, 5
      %v1124 = vrot.slane %v1107, 5
      %v1125 = vrot.slane %v1109, 5
      %vm1126 = vcmp.lt.s32.totalorder %v173, 3
      %v1127 = vsel %vm1126, %v1124, %v1125
      %v1128 = vsel %vm1126, %v1123, %v1124
      %v1129 = vsel %vm1126, %v1122, %v1123
      %v1130 = vsel %vm1126, %v1121, %v1122
      %v1131 = vsel %vm1126, %v1120, %v1121
      %v1132 = vsel %vm1126, %v1119, %v1120
      %v1133 = vsel %vm1126, %v1118, %v1119
      %v1134 = vsel %vm1126, %v1125, %v1118
      %v1135 = vsel %vm1086, 1, 0
      %v1136 = vsel %vm1087, 1, 0
      %v1137 = vsel %vm1088, 1, 0
      %v1138 = vsel %vm1089, 1, 0
      %v1139 = vsel %vm1090, 1, 0
      %v1140 = vsel %vm1091, 1, 0
      %v1141 = vsel %vm1092, 1, 0
      %v1142 = vsel %vm1093, 1, 0
      %vm1143 = vcmp.eq.s32.totalorder %v1135, 1
      %vm1144 = vcmp.eq.s32.totalorder %v1136, 1
      %vm1145 = vcmp.eq.s32.totalorder %v1137, 1
      %vm1146 = vcmp.eq.s32.totalorder %v1138, 1
      %vm1147 = vcmp.eq.s32.totalorder %v1139, 1
      %vm1148 = vcmp.eq.s32.totalorder %v1140, 1
      %vm1149 = vcmp.eq.s32.totalorder %v1141, 1
      %vm1150 = vcmp.eq.s32.totalorder %v1142, 1
      %v1151 = vsel %vm1143, %v1134, 0.0
      %v1152 = vsel %vm1144, %v1133, 0.0
      %v1153 = vsel %vm1145, %v1132, 0.0
      %v1154 = vsel %vm1146, %v1131, 0.0
      %v1155 = vsel %vm1147, %v1130, 0.0
      %v1156 = vsel %vm1148, %v1129, 0.0
      %v1157 = vsel %vm1149, %v1128, 0.0
      %v1158 = vsel %vm1150, %v1127, 0.0
      %v1159 = vadd.f32 %v1078, %v1151
      %v1160 = vadd.f32 %v1079, %v1152
      %v1161 = vadd.f32 %v1080, %v1153
      %v1162 = vadd.f32 %v1081, %v1154
      %v1163 = vadd.f32 %v1082, %v1155
      %v1164 = vadd.f32 %v1083, %v1156
      %v1165 = vadd.f32 %v1084, %v1157
      %v1166 = vadd.f32 %v1085, %v1158
      %v1167 = vld [vmem:[%s2 + $0x10] sm:$0x1]
      %v1168 = vlaneseq
      %v1169 = vshrl.u32 %v1168, 7
      %v1170 = vsub.s32 0, %v1169
      %v1171 = vrot.slane %v1167, %v1170
      %v1172 = vmul.f32 %v1171, %v716
      %v1173 = vmul.f32 %v1171, %v717
      %v1174 = vmul.f32 %v1171, %v718
      %v1175 = vmul.f32 %v1171, %v719
      %v1176 = vmul.f32 %v1171, %v720
      %v1177 = vmul.f32 %v1171, %v721
      %v1178 = vmul.f32 %v1171, %v722
      %v1179 = vmul.f32 %v1171, %v723
      %v1180 = vld [vmem:[%s2 + $0x11] sm:$0x1]
      %v1181 = vlaneseq
      %v1182 = vshrl.u32 %v1181, 7
      %v1183 = vsub.s32 0, %v1182
      %v1184 = vrot.slane %v1180, %v1183
      %v1185 = vmul.f32 %v1184, %v750
      %v1186 = vmul.f32 %v1184, %v751
      %v1187 = vmul.f32 %v1184, %v752
      %v1188 = vmul.f32 %v1184, %v753
      %v1189 = vmul.f32 %v1184, %v754
      %v1190 = vmul.f32 %v1184, %v755
      %v1191 = vmul.f32 %v1184, %v756
      %v1192 = vmul.f32 %v1184, %v757
      %v1193 = vadd.f32 %v1172, %v1185
      %v1194 = vadd.f32 %v1173, %v1186
      %v1195 = vadd.f32 %v1174, %v1187
      %v1196 = vadd.f32 %v1175, %v1188
      %v1197 = vadd.f32 %v1176, %v1189
      %v1198 = vadd.f32 %v1177, %v1190
      %v1199 = vadd.f32 %v1178, %v1191
      %v1200 = vadd.f32 %v1179, %v1192
      %v1201 = vld [vmem:[%s2 + $0x12] sm:$0x1]
      %v1202 = vlaneseq
      %v1203 = vshrl.u32 %v1202, 7
      %v1204 = vsub.s32 0, %v1203
      %v1205 = vrot.slane %v1201, %v1204
      %v1206 = vmul.f32 %v1205, %v779
      %v1207 = vmul.f32 %v1205, %v750
      %v1208 = vmul.f32 %v1205, %v751
      %v1209 = vmul.f32 %v1205, %v752
      %v1210 = vmul.f32 %v1205, %v753
      %v1211 = vmul.f32 %v1205, %v754
      %v1212 = vmul.f32 %v1205, %v755
      %v1213 = vmul.f32 %v1205, %v756
      %v1214 = vadd.f32 %v1193, %v1206
      %v1215 = vadd.f32 %v1194, %v1207
      %v1216 = vadd.f32 %v1195, %v1208
      %v1217 = vadd.f32 %v1196, %v1209
      %v1218 = vadd.f32 %v1197, %v1210
      %v1219 = vadd.f32 %v1198, %v1211
      %v1220 = vadd.f32 %v1199, %v1212
      %v1221 = vadd.f32 %v1200, %v1213
      %v1222 = vld [vmem:[%s2 + $0x13] sm:$0x1]
      %v1223 = vlaneseq
      %v1224 = vshrl.u32 %v1223, 7
      %v1225 = vsub.s32 0, %v1224
      %v1226 = vrot.slane %v1222, %v1225
      %v1227 = vmul.f32 %v1226, %v801
      %v1228 = vmul.f32 %v1226, %v779
      %v1229 = vmul.f32 %v1226, %v750
      %v1230 = vmul.f32 %v1226, %v751
      %v1231 = vmul.f32 %v1226, %v752
      %v1232 = vmul.f32 %v1226, %v753
      %v1233 = vmul.f32 %v1226, %v754
      %v1234 = vmul.f32 %v1226, %v755
      %v1235 = vadd.f32 %v1214, %v1227
      %v1236 = vadd.f32 %v1215, %v1228
      %v1237 = vadd.f32 %v1216, %v1229
      %v1238 = vadd.f32 %v1217, %v1230
      %v1239 = vadd.f32 %v1218, %v1231
      %v1240 = vadd.f32 %v1219, %v1232
      %v1241 = vadd.f32 %v1220, %v1233
      %v1242 = vadd.f32 %v1221, %v1234
      %v1243 = vld [vmem:[%s2 + $0x14] sm:$0x1]
      %v1244 = vlaneseq
      %v1245 = vshrl.u32 %v1244, 7
      %v1246 = vsub.s32 0, %v1245
      %v1247 = vrot.slane %v1243, %v1246
      %v1248 = vmul.f32 %v1247, %v823
      %v1249 = vmul.f32 %v1247, %v801
      %v1250 = vmul.f32 %v1247, %v779
      %v1251 = vmul.f32 %v1247, %v750
      %v1252 = vmul.f32 %v1247, %v751
      %v1253 = vmul.f32 %v1247, %v752
      %v1254 = vmul.f32 %v1247, %v753
      %v1255 = vmul.f32 %v1247, %v754
      %v1256 = vadd.f32 %v1235, %v1248
      %v1257 = vadd.f32 %v1236, %v1249
      %v1258 = vadd.f32 %v1237, %v1250
      %v1259 = vadd.f32 %v1238, %v1251
      %v1260 = vadd.f32 %v1239, %v1252
      %v1261 = vadd.f32 %v1240, %v1253
      %v1262 = vadd.f32 %v1241, %v1254
      %v1263 = vadd.f32 %v1242, %v1255
      %v1264 = vld [vmem:[%s2 + $0x15] sm:$0x1]
      %v1265 = vlaneseq
      %v1266 = vshrl.u32 %v1265, 7
      %v1267 = vsub.s32 0, %v1266
      %v1268 = vrot.slane %v1264, %v1267
      %v1269 = vmul.f32 %v1268, %v845
      %v1270 = vmul.f32 %v1268, %v823
      %v1271 = vmul.f32 %v1268, %v801
      %v1272 = vmul.f32 %v1268, %v779
      %v1273 = vmul.f32 %v1268, %v750
      %v1274 = vmul.f32 %v1268, %v751
      %v1275 = vmul.f32 %v1268, %v752
      %v1276 = vmul.f32 %v1268, %v753
      %v1277 = vadd.f32 %v1256, %v1269
      %v1278 = vadd.f32 %v1257, %v1270
      %v1279 = vadd.f32 %v1258, %v1271
      %v1280 = vadd.f32 %v1259, %v1272
      %v1281 = vadd.f32 %v1260, %v1273
      %v1282 = vadd.f32 %v1261, %v1274
      %v1283 = vadd.f32 %v1262, %v1275
      %v1284 = vadd.f32 %v1263, %v1276
      %v1285 = vld [vmem:[%s2 + $0x16] sm:$0x1]
      %v1286 = vlaneseq
      %v1287 = vshrl.u32 %v1286, 7
      %v1288 = vsub.s32 0, %v1287
      %v1289 = vrot.slane %v1285, %v1288
      %v1290 = vmul.f32 %v1289, %v867
      %v1291 = vmul.f32 %v1289, %v845
      %v1292 = vmul.f32 %v1289, %v823
      %v1293 = vmul.f32 %v1289, %v801
      %v1294 = vmul.f32 %v1289, %v779
      %v1295 = vmul.f32 %v1289, %v750
      %v1296 = vmul.f32 %v1289, %v751
      %v1297 = vmul.f32 %v1289, %v752
      %v1298 = vadd.f32 %v1277, %v1290
      %v1299 = vadd.f32 %v1278, %v1291
      %v1300 = vadd.f32 %v1279, %v1292
      %v1301 = vadd.f32 %v1280, %v1293
      %v1302 = vadd.f32 %v1281, %v1294
      %v1303 = vadd.f32 %v1282, %v1295
      %v1304 = vadd.f32 %v1283, %v1296
      %v1305 = vadd.f32 %v1284, %v1297
      %v1306 = vld [vmem:[%s2 + $0x17] sm:$0x1]
      %v1307 = vlaneseq
      %v1308 = vshrl.u32 %v1307, 7
      %v1309 = vsub.s32 0, %v1308
      %v1310 = vrot.slane %v1306, %v1309
      %v1311 = vmul.f32 %v1310, %v889
      %v1312 = vmul.f32 %v1310, %v867
      %v1313 = vmul.f32 %v1310, %v845
      %v1314 = vmul.f32 %v1310, %v823
      %v1315 = vmul.f32 %v1310, %v801
      %v1316 = vmul.f32 %v1310, %v779
      %v1317 = vmul.f32 %v1310, %v750
      %v1318 = vmul.f32 %v1310, %v751
      %v1319 = vadd.f32 %v1298, %v1311
      %v1320 = vadd.f32 %v1299, %v1312
      %v1321 = vadd.f32 %v1300, %v1313
      %v1322 = vadd.f32 %v1301, %v1314
      %v1323 = vadd.f32 %v1302, %v1315
      %v1324 = vadd.f32 %v1303, %v1316
      %v1325 = vadd.f32 %v1304, %v1317
      %v1326 = vadd.f32 %v1305, %v1318
      %vm1327 = vcmp.ge.s32.totalorder %v173, 4
      %vm1328 = vcmp.ge.s32.totalorder %v174, 4
      %vm1329 = vcmp.ge.s32.totalorder %v175, 4
      %vm1330 = vcmp.ge.s32.totalorder %v176, 4
      %vm1331 = vcmp.ge.s32.totalorder %v177, 4
      %vm1332 = vcmp.ge.s32.totalorder %v178, 4
      %vm1333 = vcmp.ge.s32.totalorder %v179, 4
      %vm1334 = vcmp.ge.s32.totalorder %v180, 4
      %v1335 = vrot.slane %v1319, 4
      %v1336 = vrot.slane %v1320, 4
      %v1337 = vrot.slane %v1321, 4
      %v1338 = vrot.slane %v1322, 4
      %v1339 = vrot.slane %v1323, 4
      %v1340 = vrot.slane %v1324, 4
      %v1341 = vrot.slane %v1325, 4
      %v1342 = vrot.slane %v1326, 4
      %vm1343 = vcmp.lt.s32.totalorder %v173, 4
      %v1344 = vsel %vm1343, %v1341, %v1342
      %v1345 = vsel %vm1343, %v1340, %v1341
      %v1346 = vsel %vm1343, %v1339, %v1340
      %v1347 = vsel %vm1343, %v1338, %v1339
      %v1348 = vsel %vm1343, %v1337, %v1338
      %v1349 = vsel %vm1343, %v1336, %v1337
      %v1350 = vsel %vm1343, %v1335, %v1336
      %v1351 = vsel %vm1343, %v1342, %v1335
      %v1352 = vsel %vm1327, 1, 0
      %v1353 = vsel %vm1328, 1, 0
      %v1354 = vsel %vm1329, 1, 0
      %v1355 = vsel %vm1330, 1, 0
      %v1356 = vsel %vm1331, 1, 0
      %v1357 = vsel %vm1332, 1, 0
      %v1358 = vsel %vm1333, 1, 0
      %v1359 = vsel %vm1334, 1, 0
      %vm1360 = vcmp.eq.s32.totalorder %v1352, 1
      %vm1361 = vcmp.eq.s32.totalorder %v1353, 1
      %vm1362 = vcmp.eq.s32.totalorder %v1354, 1
      %vm1363 = vcmp.eq.s32.totalorder %v1355, 1
      %vm1364 = vcmp.eq.s32.totalorder %v1356, 1
      %vm1365 = vcmp.eq.s32.totalorder %v1357, 1
      %vm1366 = vcmp.eq.s32.totalorder %v1358, 1
      %vm1367 = vcmp.eq.s32.totalorder %v1359, 1
      %v1368 = vsel %vm1360, %v1351, 0.0
      %v1369 = vsel %vm1361, %v1350, 0.0
      %v1370 = vsel %vm1362, %v1349, 0.0
      %v1371 = vsel %vm1363, %v1348, 0.0
      %v1372 = vsel %vm1364, %v1347, 0.0
      %v1373 = vsel %vm1365, %v1346, 0.0
      %v1374 = vsel %vm1366, %v1345, 0.0
      %v1375 = vsel %vm1367, %v1344, 0.0
      %v1376 = vadd.f32 %v1159, %v1368
      %v1377 = vadd.f32 %v1160, %v1369
      %v1378 = vadd.f32 %v1161, %v1370
      %v1379 = vadd.f32 %v1162, %v1371
      %v1380 = vadd.f32 %v1163, %v1372
      %v1381 = vadd.f32 %v1164, %v1373
      %v1382 = vadd.f32 %v1165, %v1374
      %v1383 = vadd.f32 %v1166, %v1375
      %vm1384 = vcmp.ge.s32.totalorder %v173, 5
      %vm1385 = vcmp.ge.s32.totalorder %v174, 5
      %vm1386 = vcmp.ge.s32.totalorder %v175, 5
      %vm1387 = vcmp.ge.s32.totalorder %v176, 5
      %vm1388 = vcmp.ge.s32.totalorder %v177, 5
      %vm1389 = vcmp.ge.s32.totalorder %v178, 5
      %vm1390 = vcmp.ge.s32.totalorder %v179, 5
      %vm1391 = vcmp.ge.s32.totalorder %v180, 5
      %1400 = vrot.lane.b32.xlu0 %v1319, 96
      %v1401 = vpop.permute.xlu0 %1400
      %1402 = vrot.lane.b32.xlu0 %v1320, 96
      %v1403 = vpop.permute.xlu0 %1402
      %1404 = vrot.lane.b32.xlu0 %v1321, 96
      %v1405 = vpop.permute.xlu0 %1404
      %1406 = vrot.lane.b32.xlu0 %v1322, 96
      %v1407 = vpop.permute.xlu0 %1406
      %1408 = vrot.lane.b32.xlu0 %v1323, 96
      %v1409 = vpop.permute.xlu0 %1408
      %1410 = vrot.lane.b32.xlu0 %v1324, 96
      %v1411 = vpop.permute.xlu0 %1410
      %1412 = vrot.lane.b32.xlu0 %v1325, 96
      %v1413 = vpop.permute.xlu0 %1412
      %1414 = vrot.lane.b32.xlu0 %v1326, 96
      %v1415 = vpop.permute.xlu0 %1414
      %v1424 = vrot.slane %v1401, 3
      %v1425 = vrot.slane %v1403, 3
      %v1426 = vrot.slane %v1405, 3
      %v1427 = vrot.slane %v1407, 3
      %v1428 = vrot.slane %v1409, 3
      %v1429 = vrot.slane %v1411, 3
      %v1430 = vrot.slane %v1413, 3
      %v1431 = vrot.slane %v1415, 3
      %vm1432 = vcmp.lt.s32.totalorder %v173, 5
      %v1433 = vsel %vm1432, %v1430, %v1431
      %v1434 = vsel %vm1432, %v1429, %v1430
      %v1435 = vsel %vm1432, %v1428, %v1429
      %v1436 = vsel %vm1432, %v1427, %v1428
      %v1437 = vsel %vm1432, %v1426, %v1427
      %v1438 = vsel %vm1432, %v1425, %v1426
      %v1439 = vsel %vm1432, %v1424, %v1425
      %v1440 = vsel %vm1432, %v1431, %v1424
      %v1441 = vsel %vm1384, 1, 0
      %v1442 = vsel %vm1385, 1, 0
      %v1443 = vsel %vm1386, 1, 0
      %v1444 = vsel %vm1387, 1, 0
      %v1445 = vsel %vm1388, 1, 0
      %v1446 = vsel %vm1389, 1, 0
      %v1447 = vsel %vm1390, 1, 0
      %v1448 = vsel %vm1391, 1, 0
      %vm1449 = vcmp.eq.s32.totalorder %v1441, 1
      %vm1450 = vcmp.eq.s32.totalorder %v1442, 1
      %vm1451 = vcmp.eq.s32.totalorder %v1443, 1
      %vm1452 = vcmp.eq.s32.totalorder %v1444, 1
      %vm1453 = vcmp.eq.s32.totalorder %v1445, 1
      %vm1454 = vcmp.eq.s32.totalorder %v1446, 1
      %vm1455 = vcmp.eq.s32.totalorder %v1447, 1
      %vm1456 = vcmp.eq.s32.totalorder %v1448, 1
      %v1457 = vsel %vm1449, %v1440, 0.0
      %v1458 = vsel %vm1450, %v1439, 0.0
      %v1459 = vsel %vm1451, %v1438, 0.0
      %v1460 = vsel %vm1452, %v1437, 0.0
      %v1461 = vsel %vm1453, %v1436, 0.0
      %v1462 = vsel %vm1454, %v1435, 0.0
      %v1463 = vsel %vm1455, %v1434, 0.0
      %v1464 = vsel %vm1456, %v1433, 0.0
      %v1465 = vadd.f32 %v1376, %v1457
      %v1466 = vadd.f32 %v1377, %v1458
      %v1467 = vadd.f32 %v1378, %v1459
      %v1468 = vadd.f32 %v1379, %v1460
      %v1469 = vadd.f32 %v1380, %v1461
      %v1470 = vadd.f32 %v1381, %v1462
      %v1471 = vadd.f32 %v1382, %v1463
      %v1472 = vadd.f32 %v1383, %v1464
      %vm1473 = vcmp.ge.s32.totalorder %v173, 6
      %vm1474 = vcmp.ge.s32.totalorder %v174, 6
      %vm1475 = vcmp.ge.s32.totalorder %v175, 6
      %vm1476 = vcmp.ge.s32.totalorder %v176, 6
      %vm1477 = vcmp.ge.s32.totalorder %v177, 6
      %vm1478 = vcmp.ge.s32.totalorder %v178, 6
      %vm1479 = vcmp.ge.s32.totalorder %v179, 6
      %vm1480 = vcmp.ge.s32.totalorder %v180, 6
      %1481 = vrot.lane.b32.xlu0 %v1319, 64
      %v1482 = vpop.permute.xlu0 %1481
      %1483 = vrot.lane.b32.xlu0 %v1320, 64
      %v1484 = vpop.permute.xlu0 %1483
      %1485 = vrot.lane.b32.xlu0 %v1321, 64
      %v1486 = vpop.permute.xlu0 %1485
      %1487 = vrot.lane.b32.xlu0 %v1322, 64
      %v1488 = vpop.permute.xlu0 %1487
      %1489 = vrot.lane.b32.xlu0 %v1323, 64
      %v1490 = vpop.permute.xlu0 %1489
      %1491 = vrot.lane.b32.xlu0 %v1324, 64
      %v1492 = vpop.permute.xlu0 %1491
      %1493 = vrot.lane.b32.xlu0 %v1325, 64
      %v1494 = vpop.permute.xlu0 %1493
      %1495 = vrot.lane.b32.xlu0 %v1326, 64
      %v1496 = vpop.permute.xlu0 %1495
      %v1505 = vrot.slane %v1482, 2
      %v1506 = vrot.slane %v1484, 2
      %v1507 = vrot.slane %v1486, 2
      %v1508 = vrot.slane %v1488, 2
      %v1509 = vrot.slane %v1490, 2
      %v1510 = vrot.slane %v1492, 2
      %v1511 = vrot.slane %v1494, 2
      %v1512 = vrot.slane %v1496, 2
      %vm1513 = vcmp.lt.s32.totalorder %v173, 6
      %v1514 = vsel %vm1513, %v1511, %v1512
      %v1515 = vsel %vm1513, %v1510, %v1511
      %v1516 = vsel %vm1513, %v1509, %v1510
      %v1517 = vsel %vm1513, %v1508, %v1509
      %v1518 = vsel %vm1513, %v1507, %v1508
      %v1519 = vsel %vm1513, %v1506, %v1507
      %v1520 = vsel %vm1513, %v1505, %v1506
      %v1521 = vsel %vm1513, %v1512, %v1505
      %v1522 = vsel %vm1473, 1, 0
      %v1523 = vsel %vm1474, 1, 0
      %v1524 = vsel %vm1475, 1, 0
      %v1525 = vsel %vm1476, 1, 0
      %v1526 = vsel %vm1477, 1, 0
      %v1527 = vsel %vm1478, 1, 0
      %v1528 = vsel %vm1479, 1, 0
      %v1529 = vsel %vm1480, 1, 0
      %vm1530 = vcmp.eq.s32.totalorder %v1522, 1
      %vm1531 = vcmp.eq.s32.totalorder %v1523, 1
      %vm1532 = vcmp.eq.s32.totalorder %v1524, 1
      %vm1533 = vcmp.eq.s32.totalorder %v1525, 1
      %vm1534 = vcmp.eq.s32.totalorder %v1526, 1
      %vm1535 = vcmp.eq.s32.totalorder %v1527, 1
      %vm1536 = vcmp.eq.s32.totalorder %v1528, 1
      %vm1537 = vcmp.eq.s32.totalorder %v1529, 1
      %v1538 = vsel %vm1530, %v1521, 0.0
      %v1539 = vsel %vm1531, %v1520, 0.0
      %v1540 = vsel %vm1532, %v1519, 0.0
      %v1541 = vsel %vm1533, %v1518, 0.0
      %v1542 = vsel %vm1534, %v1517, 0.0
      %v1543 = vsel %vm1535, %v1516, 0.0
      %v1544 = vsel %vm1536, %v1515, 0.0
      %v1545 = vsel %vm1537, %v1514, 0.0
      %v1546 = vadd.f32 %v1465, %v1538
      %v1547 = vadd.f32 %v1466, %v1539
      %v1548 = vadd.f32 %v1467, %v1540
      %v1549 = vadd.f32 %v1468, %v1541
      %v1550 = vadd.f32 %v1469, %v1542
      %v1551 = vadd.f32 %v1470, %v1543
      %v1552 = vadd.f32 %v1471, %v1544
      %v1553 = vadd.f32 %v1472, %v1545
      %vm1554 = vcmp.ge.s32.totalorder %v173, 7
      %vm1555 = vcmp.ge.s32.totalorder %v174, 7
      %vm1556 = vcmp.ge.s32.totalorder %v175, 7
      %vm1557 = vcmp.ge.s32.totalorder %v176, 7
      %vm1558 = vcmp.ge.s32.totalorder %v177, 7
      %vm1559 = vcmp.ge.s32.totalorder %v178, 7
      %vm1560 = vcmp.ge.s32.totalorder %v179, 7
      %vm1561 = vcmp.ge.s32.totalorder %v180, 7
      %1562 = vrot.lane.b32.xlu0 %v1319, 32
      %v1563 = vpop.permute.xlu0 %1562
      %1564 = vrot.lane.b32.xlu0 %v1320, 32
      %v1565 = vpop.permute.xlu0 %1564
      %1566 = vrot.lane.b32.xlu0 %v1321, 32
      %v1567 = vpop.permute.xlu0 %1566
      %1568 = vrot.lane.b32.xlu0 %v1322, 32
      %v1569 = vpop.permute.xlu0 %1568
      %1570 = vrot.lane.b32.xlu0 %v1323, 32
      %v1571 = vpop.permute.xlu0 %1570
      %1572 = vrot.lane.b32.xlu0 %v1324, 32
      %v1573 = vpop.permute.xlu0 %1572
      %1574 = vrot.lane.b32.xlu0 %v1325, 32
      %v1575 = vpop.permute.xlu0 %1574
      %1576 = vrot.lane.b32.xlu0 %v1326, 32
      %v1577 = vpop.permute.xlu0 %1576
      %v1586 = vrot.slane %v1563, 1
      %v1587 = vrot.slane %v1565, 1
      %v1588 = vrot.slane %v1567, 1
      %v1589 = vrot.slane %v1569, 1
      %v1590 = vrot.slane %v1571, 1
      %v1591 = vrot.slane %v1573, 1
      %v1592 = vrot.slane %v1575, 1
      %v1593 = vrot.slane %v1577, 1
      %vm1594 = vcmp.lt.s32.totalorder %v173, 7
      %v1595 = vsel %vm1594, %v1592, %v1593
      %v1596 = vsel %vm1594, %v1591, %v1592
      %v1597 = vsel %vm1594, %v1590, %v1591
      %v1598 = vsel %vm1594, %v1589, %v1590
      %v1599 = vsel %vm1594, %v1588, %v1589
      %v1600 = vsel %vm1594, %v1587, %v1588
      %v1601 = vsel %vm1594, %v1586, %v1587
      %v1602 = vsel %vm1594, %v1593, %v1586
      %v1603 = vsel %vm1554, 1, 0
      %v1604 = vsel %vm1555, 1, 0
      %v1605 = vsel %vm1556, 1, 0
      %v1606 = vsel %vm1557, 1, 0
      %v1607 = vsel %vm1558, 1, 0
      %v1608 = vsel %vm1559, 1, 0
      %v1609 = vsel %vm1560, 1, 0
      %v1610 = vsel %vm1561, 1, 0
      %vm1611 = vcmp.eq.s32.totalorder %v1603, 1
      %vm1612 = vcmp.eq.s32.totalorder %v1604, 1
      %vm1613 = vcmp.eq.s32.totalorder %v1605, 1
      %vm1614 = vcmp.eq.s32.totalorder %v1606, 1
      %vm1615 = vcmp.eq.s32.totalorder %v1607, 1
      %vm1616 = vcmp.eq.s32.totalorder %v1608, 1
      %vm1617 = vcmp.eq.s32.totalorder %v1609, 1
      %vm1618 = vcmp.eq.s32.totalorder %v1610, 1
      %v1619 = vsel %vm1611, %v1602, 0.0
      %v1620 = vsel %vm1612, %v1601, 0.0
      %v1621 = vsel %vm1613, %v1600, 0.0
      %v1622 = vsel %vm1614, %v1599, 0.0
      %v1623 = vsel %vm1615, %v1598, 0.0
      %v1624 = vsel %vm1616, %v1597, 0.0
      %v1625 = vsel %vm1617, %v1596, 0.0
      %v1626 = vsel %vm1618, %v1595, 0.0
      %v1627 = vadd.f32 %v1546, %v1619
      %v1628 = vadd.f32 %v1547, %v1620
      %v1629 = vadd.f32 %v1548, %v1621
      %v1630 = vadd.f32 %v1549, %v1622
      %v1631 = vadd.f32 %v1550, %v1623
      %v1632 = vadd.f32 %v1551, %v1624
      %v1633 = vadd.f32 %v1552, %v1625
      %v1634 = vadd.f32 %v1553, %v1626
      %v1635 = vmul.f32 %v1627, %v544
      %v1636 = vmul.f32 %v1628, %v545
      %v1637 = vmul.f32 %v1629, %v546
      %v1638 = vmul.f32 %v1630, %v547
      %v1639 = vmul.f32 %v1631, %v548
      %v1640 = vmul.f32 %v1632, %v549
      %v1641 = vmul.f32 %v1633, %v550
      %v1642 = vmul.f32 %v1634, %v551
      %v1643 = vpack.c.bf16 %v1636, %v1635
      %v1644 = vpack.c.bf16 %v1638, %v1637
      %v1645 = vpack.c.bf16 %v1640, %v1639
      %v1646 = vpack.c.bf16 %v1642, %v1641
      %v1647 = vld [vmem:[%s2 + $0x6] sm:$0x1]
      %v1648 = vlaneseq
      %v1649 = vshrl.u32 %v1648, 7
      %v1650 = vsub.s32 0, %v1649
      %v1651 = vrot.slane %v1647, %v1650
      %1652 = vrot.lane.b32.xlu0 %v306, 32
      %v1653 = vpop.permute.xlu0 %1652
      %1654 = vrot.lane.b32.xlu0 %v307, 32
      %v1655 = vpop.permute.xlu0 %1654
      %v1659 = vsel %vm310, %v1643, 0
      %v1662 = vsel %vm310, %v1644, 0
      %v1665 = vsel %vm310, %v1645, 0
      %v1668 = vsel %vm310, %v1646, 0
      %1670 = vmatprep.subr.bf16.mxu0 0
      %1671 = vmatpush1.bf16.msra.mxu0 %v1653
      %1672 = vmatprep.subr.bf16.mxu0 0
      %1673 = vmatpush1.bf16.msra.mxu0 %v1655
      %1674 = vmatprep.subr.bf16.mxu0 0
      %1675 = vmatpush1.bf16.msra.mxu0 0
      %1676 = vmatprep.subr.bf16.mxu0 0
      %1677 = vmatpush1.bf16.msra.mxu0 0
      %1678 = vmatprep.subr.bf16.mxu0 0
      %1679 = vmatpush1.bf16.msra.mxu0 0
      %1680 = vmatprep.subr.bf16.mxu0 0
      %1681 = vmatpush1.bf16.msra.mxu0 0
      %1682 = vmatprep.subr.bf16.mxu0 0
      %1683 = vmatpush1.bf16.msra.mxu0 0
      %1684 = vmatprep.subr.bf16.mxu0 0
      %1685 = vmatpush1.bf16.msra.mxu0 0
      %1686 = vmatprep.subr.bf16.mxu0 0
      %1687 = vmatpush1.bf16.msra.mxu0 0
      %1688 = vmatprep.subr.bf16.mxu0 0
      %1689 = vmatpush1.bf16.msra.mxu0 0
      %1690 = vmatprep.subr.bf16.mxu0 0
      %1691 = vmatpush1.bf16.msra.mxu0 0
      %1692 = vmatprep.subr.bf16.mxu0 0
      %1693 = vmatpush1.bf16.msra.mxu0 0
      %1694 = vmatprep.subr.bf16.mxu0 0
      %1695 = vmatpush1.bf16.msra.mxu0 0
      %1696 = vmatprep.subr.bf16.mxu0 0
      %1697 = vmatpush1.bf16.msra.mxu0 0
      %1698 = vmatprep.subr.bf16.mxu0 0
      %1699 = vmatpush1.bf16.msra.mxu0 0
      %1700 = vmatprep.subr.bf16.mxu0 0
      %1701 = vmatpush1.bf16.msra.mxu0 0
      %1702 = vmatprep.mubr.bf16.mxu0 0
      %1703 = vmatmul.mubr.bf16.gmra.mrb[0].mxu0 %v1659
      %v1704 = vpop.f32.mrb[0].mxu0
      %v1705 = vadd.f32 %v1651, %v1704
      %v1706 = vpop.f32.mrb[0].mxu0
      %v1707 = vpop.f32.mrb[0].mxu0
      %v1708 = vadd.f32 %v1651, %v1707
      %v1709 = vpop.f32.mrb[0].mxu0
      %1710 = vmatprep.mubr.bf16.mxu0 0
      %1711 = vmatmul.mubr.bf16.gmra.mrb[0].mxu0 %v1662
      %v1712 = vpop.f32.mrb[0].mxu0
      %v1713 = vadd.f32 %v1651, %v1712
      %v1714 = vpop.f32.mrb[0].mxu0
      %v1715 = vpop.f32.mrb[0].mxu0
      %v1716 = vadd.f32 %v1651, %v1715
      %v1717 = vpop.f32.mrb[0].mxu0
      %1718 = vmatprep.mubr.bf16.mxu0 0
      %1719 = vmatmul.mubr.bf16.gmra.mrb[0].mxu0 %v1665
      %v1720 = vpop.f32.mrb[0].mxu0
      %v1721 = vadd.f32 %v1651, %v1720
      %v1722 = vpop.f32.mrb[0].mxu0
      %v1723 = vpop.f32.mrb[0].mxu0
      %v1724 = vadd.f32 %v1651, %v1723
      %v1725 = vpop.f32.mrb[0].mxu0
      %1726 = vmatprep.mubr.bf16.mxu0 0
      %1727 = vmatmul.mubr.bf16.gmra.mrb[0].mxu0 %v1668
      %v1728 = vpop.f32.mrb[0].mxu0
      %v1729 = vadd.f32 %v1651, %v1728
      %v1730 = vpop.f32.mrb[0].mxu0
      %v1731 = vpop.f32.mrb[0].mxu0
      %v1732 = vadd.f32 %v1651, %v1731
      %v1733 = vpop.f32.mrb[0].mxu0
      %1734 = vdwg.mxu0
      %1735 = vst.msk [vmem:[%s170] sm:$0xff] %vm310, %v1705
      %1736 = vst.msk [vmem:[%s170 + $0x8] sm:$0xff] %vm310, %v1708
      %1737 = vst.msk [vmem:[%s170 + $0x10] sm:$0xff] %vm310, %v1713
      %1738 = vst.msk [vmem:[%s170 + $0x18] sm:$0xff] %vm310, %v1716
      %1739 = vst.msk [vmem:[%s170 + $0x20] sm:$0xff] %vm310, %v1721
      %1740 = vst.msk [vmem:[%s170 + $0x28] sm:$0xff] %vm310, %v1724
      %1741 = vst.msk [vmem:[%s170 + $0x30] sm:$0xff] %vm310, %v1729
      %1742 = vst.msk [vmem:[%s170 + $0x38] sm:$0xff] %vm310, %v1732
      %p1743 = scmp.lt.s32.totalorder %s14, 1
      %s1744 = scalar_select %p1743, %s14, 1
      %s1745 = smul.addr %s1744, 8
      %s1746 = smul.addr %s1745, 8
      %s1747 = scalar_lea.vmem %s3, %s1746
      // Predicated region
      $region33: #{tpu_custom_call.1} parent=31 // pred_check
        %p1748 = pneg %p100
      $region34: #{tpu_custom_call.1} parent=31 // pred_check_branch
        %1750 = sbr.rel (%p1748) target = $region36
      $region35: #{tpu_custom_call.1} parent=31 // pred_region
        _
      $region36: #{tpu_custom_call.1} parent=31 // pred_fallthru
        _
    $region32: #{tpu_custom_call.1} parent=5 // pred_fallthru
      _
    %p1751 = scmp.le.s32.totalorder 2, %s9
    // Predicated region
    $region37: #{tpu_custom_call.1} parent=5 // pred_check
      %p1752 = pneg %p1751
    $region38: #{tpu_custom_call.1} parent=5 // pred_check_branch
      %1754 = sbr.rel (%p1752) target = $region40
    $region39: #{tpu_custom_call.1} parent=5 // pred_region
      %s1755 = ssub.s32 %s9, 2
      // Predicated region
      $region41: #{tpu_custom_call.1} parent=39 // pred_check
        %p1756 = pneg %p106
      $region42: #{tpu_custom_call.1} parent=39 // pred_check_branch
        %1758 = sbr.rel (%p1756) target = $region44
      $region43: #{tpu_custom_call.1} parent=39 // pred_region
        %p1759 = scmp.lt.s32.totalorder %s15, 1
        %s1760 = scalar_select %p1759, %s15, 1
        %s1761 = smul.addr %s1760, 8
        %s1762 = smul.addr %s1761, 8
        %s1763 = scalar_lea.vmem %s3, %s1762
      $region44: #{tpu_custom_call.1} parent=39 // pred_fallthru
        _
    $region40: #{tpu_custom_call.1} parent=5 // pred_fallthru
      _
  $region6: #{tpu_custom_call.1} parent=0 // loop_footer
    %s13 = sadd.s32 1, %s9
  $region7: #{tpu_custom_call.1} parent=0 // loop_footer_branch
    %8 = sbr.rel target = $region3
  $region8: #{tpu_custom_call.1} parent=0 // loop_exit
    _

</llo_original>
